<compile_context>
chip_gen: v6e
topology: v6e:2x2x1
jax: 0.10.0
libtpu: 0.0.40
codegen_flags: <defaults>
</compile_context>

<pallas_src>
import jax
import jax.numpy as jnp
from jax.experimental import pallas as pl
from jax.experimental.pallas import tpu as pltpu


# 3x3 taps in (ky, kx) row-major order; offsets oy = ky - 1, ox = kx - 1.
_TAPS = tuple((oy, ox) for oy in (-1, 0, 1) for ox in (-1, 0, 1))


def _slot(k):
    """Sublane-aligned (multiple of 8) slot size for one conv tap's rows."""
    return ((k + 7) // 8) * 8


def _tap_masks_host(H, W, reps):
    """(9, reps*H*W) f32 validity masks, one row per 3x3 tap, tiled over the
    folded lane axis (the mask depends only on p = lane % (H*W)).  Replaces the
    in-kernel iota/div/mod mask construction and any host-side zero padding."""
    HW = H * W
    p = jnp.arange(HW)
    ypos = p // W
    xpos = p % W
    rows = []
    for oy, ox in _TAPS:
        valid = ((ypos + oy >= 0) & (ypos + oy <= H - 1) &
                 (xpos + ox >= 0) & (xpos + ox <= W - 1))
        rows.append(valid)
    m = jnp.stack(rows).astype(jnp.float32)          # (9, HW)
    return jnp.tile(m, (1, reps))                    # (9, reps*HW)


def _pack_conv_weight(w, slot):
    """torch (Cout, Cin, 3, 3) -> (Cout, 9*slot); column t*slot + cin holds
    w[cout, cin, ky, kx] with t = ky*3 + kx; slot-padding columns are zero."""
    cout, cin = w.shape[0], w.shape[1]
    wt = jnp.transpose(w, (2, 3, 0, 1)).reshape(9, cout, cin)
    wt = jnp.pad(wt, ((0, 0), (0, 0), (0, slot - cin)))
    return jnp.transpose(wt, (1, 0, 2)).reshape(cout, 9 * slot)


# -----------------------------------------------------------------------------
# Fused kernel: conv_channel + ReLU  ->  conv_batch + ReLU + GAP + fc + argmax
#               -> grouped mean / unbiased var -> normalize + affine.
# -----------------------------------------------------------------------------
def _make_fused_kernel(N, C, G, H, W, slot_c, slot_n, eps):
    HW = H * W
    Lx = N * HW          # lane width of x / conv_channel patch
    Lb = C * HW          # lane width of xc (batch-major) / conv_batch patch
    inv_hw = 1.0 / float(HW)
    elems_per_channel = float(N * HW)

    def _fill_patch(src, patch_ref, n_rows, slot, mask_ref, lanes):
        # 9 lane-rolled, boundary-masked copies of `src` at 8-aligned slots.
        # Rolling the whole folded slab is safe: wrap positions across image /
        # channel blocks land exactly on the masked boundary taps.
        for t, (oy, ox) in enumerate(_TAPS):
            shift = (-(oy * W + ox)) % lanes
            piece = pltpu.roll(src, shift, axis=1) if shift else src
            if not (oy == 0 and ox == 0):
                piece = piece * mask_ref[t:t + 1, :]     # fused zero padding
            patch_ref[t * slot:t * slot + n_rows, :] = piece

    def kernel(x_ref, wcc_ref, wcb_ref, mask_n_ref, mask_c_ref,
               wfc_ref, bfc_ref, gamma_ref, beta_ref,
               o_ref, patch_c_ref, patch_b_ref):
        # Single grid step -> the slot-padding rows are zeroed exactly once per
        # call (stale VMEM could hold NaN/Inf; the matching packed-weight
        # columns are zero, but 0 * Inf = NaN).
        patch_c_ref[...] = jnp.zeros_like(patch_c_ref)
        patch_b_ref[...] = jnp.zeros_like(patch_b_ref)

        x = x_ref[...]                                              # (C, N*HW)

        # --- conv_channel (3x3, pad=1) + ReLU: roll+mask im2col, ONE matmul --
        _fill_patch(x, patch_c_ref, C, slot_c, mask_n_ref, Lx)
        xc = jnp.maximum(
            jnp.dot(wcc_ref[...], patch_c_ref[...],
                    preferred_element_type=jnp.float32), 0.0)       # (C, N*HW)

        # --- torch.transpose(x_, 0, 1): in-VMEM relayout to batch-on-sublanes
        xc_nc = jnp.transpose(xc.reshape(C, N, HW), (1, 0, 2)).reshape(N, Lb)

        # --- conv_batch + ReLU + global avg-pool: ONE batched MXU matmul -----
        # TODO(synk): AvgPool2d(kernel_size=H) equals this global mean only for
        # square inputs (H == W), matching the module's intended use.
        _fill_patch(xc_nc, patch_b_ref, N, slot_n, mask_c_ref, Lb)
        convb = jnp.maximum(
            jnp.dot(wcb_ref[...], patch_b_ref[...],
                    preferred_element_type=jnp.float32), 0.0)       # (N, C*HW)
        feat_nc = jnp.sum(convb.reshape(N, C, HW), axis=2) * inv_hw  # (N, C)
        feat_cn = jnp.transpose(feat_nc, (1, 0))                     # (C, N)

        # --- fc (two bias-Linears folded into one affine on the host); the
        #     softmax is dropped: argmax(softmax(z)) == argmax(z) --------------
        logits = jnp.dot(feat_cn, wfc_ref[...],
                         preferred_element_type=jnp.float32) + bfc_ref[...]

        # --- argmax (first-max tie break) -> one-hot group assignment (C, G) -
        lane_g = jax.lax.broadcasted_iota(jnp.int32, (C, G), 1)
        rowmax = jnp.max(logits, axis=1, keepdims=True)
        score = jnp.where(logits == rowmax, G - lane_g, 0)
        pick = jnp.max(score, axis=1, keepdims=True)
        onehot = jnp.where(score == pick, 1.0, 0.0)                 # (C, G)

        # --- grouped statistics: mean from per-channel sums; variance from a
        #     centered second pass over the VMEM-resident x -------------------
        sum_c = jnp.sum(x, axis=1, keepdims=True)                   # (C, 1)
        cnt_g = jnp.sum(onehot, axis=0, keepdims=True) * elems_per_channel
        sum_g = jnp.sum(onehot * sum_c, axis=0, keepdims=True)      # (1, G)
        mean_g = sum_g / jnp.maximum(cnt_g, 1.0)                    # empty-group guard
        mean_c = jnp.sum(onehot * mean_g, axis=1, keepdims=True)    # (C, 1)

        d = x - mean_c                                              # reused below
        csum_c = jnp.sum(d * d, axis=1, keepdims=True)              # (C, 1)
        # unbiased variance (torch.Tensor.var default: divide by n - 1)
        var_g = (jnp.sum(onehot * csum_c, axis=0, keepdims=True)
                 / jnp.maximum(cnt_g - 1.0, 1.0))
        invstd_g = jax.lax.rsqrt(var_g + jnp.float32(eps))          # (1, G)
        invstd_c = jnp.sum(onehot * invstd_g, axis=1, keepdims=True)  # (C, 1)

        # --- normalize + module affine; lane-dense (N*HW-wide) store ---------
        o_ref[...] = d * (gamma_ref[...] * invstd_c) + beta_ref[...]

    return kernel


# -----------------------------------------------------------------------------
# Wrapper: weight packing + layout plumbing only (XLA reshape/transpose).
# -----------------------------------------------------------------------------
def proposed_ver2_forward(x_nchw, params, group, eps=1e-5):
    N, C, H, W = x_nchw.shape
    HW = H * W
    G = group
    slot_c, slot_n = _slot(C), _slot(N)

    # Channels on sublanes, (batch, spatial) folded onto the lane axis.
    x_cn = jnp.transpose(x_nchw, (1, 0, 2, 3)).reshape(C, N * HW)

    wcc = _pack_conv_weight(params["w_cc"], slot_c)      # (C, 9*slot_c)
    wcb = _pack_conv_weight(params["w_cb"], slot_n)      # (N, 9*slot_n)
    # Fold Linear(N,N) . Linear(N,G) (no activation in between) into one
    # affine:  logits = feat @ (W2 @ W1)^T + (W2 @ b1 + b2)
    w1, b1 = params["w1"], params["b1"]
    w2, b2 = params["w2"], params["b2"]
    wfc = jnp.transpose(w2 @ w1)                         # (N, G)
    bfc = (w2 @ b1 + b2).reshape(1, G)
    gamma = params["gamma"].reshape(C, 1)
    beta = params["beta"].reshape(C, 1)
    mask_n = _tap_masks_host(H, W, N)                    # (9, N*HW)
    mask_c = _tap_masks_host(H, W, C)                    # (9, C*HW)

    def full(shape):
        zeros = (0,) * len(shape)
        return pl.BlockSpec(shape, lambda i, _z=zeros: _z)

    # TODO(synk): for production feature-map sizes this fused kernel must be
    # blocked over C (grid axis + pl.when-accumulated stats) so live VMEM stays
    # under ~24-32 MiB on v7x and both TensorCores participate.
    y_cn = pl.pallas_call(
        _make_fused_kernel(N, C, G, H, W, slot_c, slot_n, eps),
        out_shape=jax.ShapeDtypeStruct((C, N * HW), jnp.float32),
        grid=(1,),
        in_specs=[full(x_cn.shape), full(wcc.shape), full(wcb.shape),
                  full(mask_n.shape), full(mask_c.shape),
                  full(wfc.shape), full(bfc.shape),
                  full(gamma.shape), full(beta.shape)],
        out_specs=full((C, N * HW)),
        scratch_shapes=[pltpu.VMEM((9 * slot_c, N * HW), jnp.float32),
                        pltpu.VMEM((9 * slot_n, C * HW), jnp.float32)],
        compiler_params=pltpu.CompilerParams(
            dimension_semantics=("arbitrary",),
            vmem_limit_bytes=32 * 1024 * 1024),
    )(x_cn, wcc, wcb, mask_n, mask_c, wfc, bfc, gamma, beta)

    return jnp.transpose(y_cn.reshape(C, N, H, W), (1, 0, 2, 3))


if __name__ == "__main__":
    # small shapes consistent with the module: batch=2, channels=4, spatial=16
    N, C, H, W, G = 2, 4, 16, 16, 2
    key = jax.random.PRNGKey(0)
    ks = jax.random.split(key, 8)

    x = jax.random.normal(ks[0], (N, C, H, W), jnp.float32)

    params = {
        # conv weights in torch layout (Cout, Cin, kh, kw)
        "w_cc": 0.1 * jax.random.normal(ks[1], (C, C, 3, 3), jnp.float32),
        "w_cb": 0.1 * jax.random.normal(ks[2], (N, N, 3, 3), jnp.float32),
        # fc weights in torch layout (out, in); biases (out,)
        "w1": 0.1 * jax.random.normal(ks[3], (N, N), jnp.float32),
        "b1": 0.01 * jax.random.normal(ks[4], (N,), jnp.float32),
        "w2": 0.1 * jax.random.normal(ks[5], (G, N), jnp.float32),
        "b2": 0.01 * jax.random.normal(ks[6], (G,), jnp.float32),
        # module's affine params (1, C, 1, 1): ones / zeros
        "gamma": jnp.ones((1, C, 1, 1), jnp.float32),
        "beta": jnp.zeros((1, C, 1, 1), jnp.float32),
    }

    out = proposed_ver2_forward(x, params, group=G, eps=1e-5)
    out = jax.block_until_ready(out)
    assert out.shape == (N, C, H, W) and out.dtype == jnp.float32
    assert bool(jnp.all(jnp.isfinite(out)))
    print("KERNEL_OK")
</pallas_src>

<mosaic_0001>
module attributes {stable_mosaic.version = 11 : i64} {
  func.func @kernel(%arg0: i32, %arg1: memref<4x512xf32, #tpu.memory_space<vmem>>, %arg2: memref<4x72xf32, #tpu.memory_space<vmem>>, %arg3: memref<2x72xf32, #tpu.memory_space<vmem>>, %arg4: memref<9x512xf32, #tpu.memory_space<vmem>>, %arg5: memref<9x1024xf32, #tpu.memory_space<vmem>>, %arg6: memref<2x2xf32, #tpu.memory_space<vmem>>, %arg7: memref<1x2xf32, #tpu.memory_space<vmem>>, %arg8: memref<4x1xf32, #tpu.memory_space<vmem>>, %arg9: memref<4x1xf32, #tpu.memory_space<vmem>>, %arg10: memref<4x512xf32, #tpu.memory_space<vmem>>, %arg11: memref<72x512xf32, #tpu.memory_space<vmem>>, %arg12: memref<72x1024xf32, #tpu.memory_space<vmem>>) attributes {dimension_semantics = [#tpu.dimension_semantics<arbitrary>], iteration_bounds = array<i64: 1>, scalar_prefetch = 0 : i64, scratch_operands = 2 : i64, tpu.core_type = #tpu.core_type<tc>, window_params = [{pipeline_mode = #tpu.pipeline_mode<synchronous>, transform_indices = @transform_0, window_bounds = array<i64: 4, 512>}, {pipeline_mode = #tpu.pipeline_mode<synchronous>, transform_indices = @transform_1, window_bounds = array<i64: 4, 72>}, {pipeline_mode = #tpu.pipeline_mode<synchronous>, transform_indices = @transform_2, window_bounds = array<i64: 2, 72>}, {pipeline_mode = #tpu.pipeline_mode<synchronous>, transform_indices = @transform_3, window_bounds = array<i64: 9, 512>}, {pipeline_mode = #tpu.pipeline_mode<synchronous>, transform_indices = @transform_4, window_bounds = array<i64: 9, 1024>}, {pipeline_mode = #tpu.pipeline_mode<synchronous>, transform_indices = @transform_5, window_bounds = array<i64: 2, 2>}, {pipeline_mode = #tpu.pipeline_mode<synchronous>, transform_indices = @transform_6, window_bounds = array<i64: 1, 2>}, {pipeline_mode = #tpu.pipeline_mode<synchronous>, transform_indices = @transform_7, window_bounds = array<i64: 4, 1>}, {pipeline_mode = #tpu.pipeline_mode<synchronous>, transform_indices = @transform_8, window_bounds = array<i64: 4, 1>}, {pipeline_mode = #tpu.pipeline_mode<synchronous>, transform_indices = @transform_9, window_bounds = array<i64: 4, 512>}]} {
    %cst = arith.constant 0.000000e+00 : f32
    %0 = vector.broadcast %cst : f32 to vector<72x512xf32>
    %c0 = arith.constant 0 : index
    %c0_0 = arith.constant 0 : index
    %1 = vector.load %arg11[%c0, %c0_0] : memref<72x512xf32, #tpu.memory_space<vmem>>, vector<72x512xf32>
    tpu.vector_store %arg11[%c0, %c0_0], %0 {strides = array<i32>} : memref<72x512xf32, #tpu.memory_space<vmem>>, vector<72x512xf32>,
    %cst_1 = arith.constant 0.000000e+00 : f32
    %2 = vector.broadcast %cst_1 : f32 to vector<72x1024xf32>
    %c0_2 = arith.constant 0 : index
    %c0_3 = arith.constant 0 : index
    %3 = vector.load %arg12[%c0_2, %c0_3] : memref<72x1024xf32, #tpu.memory_space<vmem>>, vector<72x1024xf32>
    tpu.vector_store %arg12[%c0_2, %c0_3], %2 {strides = array<i32>} : memref<72x1024xf32, #tpu.memory_space<vmem>>, vector<72x1024xf32>,
    %c0_4 = arith.constant 0 : index
    %c0_5 = arith.constant 0 : index
    %4 = vector.load %arg1[%c0_4, %c0_5] : memref<4x512xf32, #tpu.memory_space<vmem>>, vector<4x512xf32>
    %c17_i32 = arith.constant 17 : i32
    %5 = tpu.dynamic_rotate %4 by %c17_i32 dim 1 : vector<4x512xf32>, i32 -> vector<4x512xf32>
    %c0_6 = arith.constant 0 : index
    %c0_7 = arith.constant 0 : index
    %6 = vector.load %arg4[%c0_6, %c0_7] : memref<9x512xf32, #tpu.memory_space<vmem>>, vector<1x512xf32>
    %7 = vector.broadcast %6 : vector<1x512xf32> to vector<4x512xf32>
    %8 = arith.mulf %5, %7 : vector<4x512xf32>
    %c0_8 = arith.constant 0 : index
    %c0_9 = arith.constant 0 : index
    %9 = vector.load %arg11[%c0_8, %c0_9] : memref<72x512xf32, #tpu.memory_space<vmem>>, vector<4x512xf32>
    tpu.vector_store %arg11[%c0_8, %c0_9], %8 {strides = array<i32>} : memref<72x512xf32, #tpu.memory_space<vmem>>, vector<4x512xf32>,
    %c16_i32 = arith.constant 16 : i32
    %10 = tpu.dynamic_rotate %4 by %c16_i32 dim 1 : vector<4x512xf32>, i32 -> vector<4x512xf32>
    %c1 = arith.constant 1 : index
    %c0_10 = arith.constant 0 : index
    %11 = vector.load %arg4[%c1, %c0_10] : memref<9x512xf32, #tpu.memory_space<vmem>>, vector<1x512xf32>
    %12 = vector.broadcast %11 : vector<1x512xf32> to vector<4x512xf32>
    %13 = arith.mulf %10, %12 : vector<4x512xf32>
    %c8 = arith.constant 8 : index
    %c0_11 = arith.constant 0 : index
    %14 = vector.load %arg11[%c8, %c0_11] : memref<72x512xf32, #tpu.memory_space<vmem>>, vector<4x512xf32>
    tpu.vector_store %arg11[%c8, %c0_11], %13 {strides = array<i32>} : memref<72x512xf32, #tpu.memory_space<vmem>>, vector<4x512xf32>,
    %c15_i32 = arith.constant 15 : i32
    %15 = tpu.dynamic_rotate %4 by %c15_i32 dim 1 : vector<4x512xf32>, i32 -> vector<4x512xf32>
    %c2 = arith.constant 2 : index
    %c0_12 = arith.constant 0 : index
    %16 = vector.load %arg4[%c2, %c0_12] : memref<9x512xf32, #tpu.memory_space<vmem>>, vector<1x512xf32>
    %17 = vector.broadcast %16 : vector<1x512xf32> to vector<4x512xf32>
    %18 = arith.mulf %15, %17 : vector<4x512xf32>
    %c16 = arith.constant 16 : index
    %c0_13 = arith.constant 0 : index
    %19 = vector.load %arg11[%c16, %c0_13] : memref<72x512xf32, #tpu.memory_space<vmem>>, vector<4x512xf32>
    tpu.vector_store %arg11[%c16, %c0_13], %18 {strides = array<i32>} : memref<72x512xf32, #tpu.memory_space<vmem>>, vector<4x512xf32>,
    %c1_i32 = arith.constant 1 : i32
    %20 = tpu.dynamic_rotate %4 by %c1_i32 dim 1 : vector<4x512xf32>, i32 -> vector<4x512xf32>
    %c3 = arith.constant 3 : index
    %c0_14 = arith.constant 0 : index
    %21 = vector.load %arg4[%c3, %c0_14] : memref<9x512xf32, #tpu.memory_space<vmem>>, vector<1x512xf32>
    %22 = vector.broadcast %21 : vector<1x512xf32> to vector<4x512xf32>
    %23 = arith.mulf %20, %22 : vector<4x512xf32>
    %c24 = arith.constant 24 : index
    %c0_15 = arith.constant 0 : index
    %24 = vector.load %arg11[%c24, %c0_15] : memref<72x512xf32, #tpu.memory_space<vmem>>, vector<4x512xf32>
    tpu.vector_store %arg11[%c24, %c0_15], %23 {strides = array<i32>} : memref<72x512xf32, #tpu.memory_space<vmem>>, vector<4x512xf32>,
    %c32 = arith.constant 32 : index
    %c0_16 = arith.constant 0 : index
    %25 = vector.load %arg11[%c32, %c0_16] : memref<72x512xf32, #tpu.memory_space<vmem>>, vector<4x512xf32>
    tpu.vector_store %arg11[%c32, %c0_16], %4 {strides = array<i32>} : memref<72x512xf32, #tpu.memory_space<vmem>>, vector<4x512xf32>,
    %c511_i32 = arith.constant 511 : i32
    %26 = tpu.dynamic_rotate %4 by %c511_i32 dim 1 : vector<4x512xf32>, i32 -> vector<4x512xf32>
    %c5 = arith.constant 5 : index
    %c0_17 = arith.constant 0 : index
    %27 = vector.load %arg4[%c5, %c0_17] : memref<9x512xf32, #tpu.memory_space<vmem>>, vector<1x512xf32>
    %28 = vector.broadcast %27 : vector<1x512xf32> to vector<4x512xf32>
    %29 = arith.mulf %26, %28 : vector<4x512xf32>
    %c40 = arith.constant 40 : index
    %c0_18 = arith.constant 0 : index
    %30 = vector.load %arg11[%c40, %c0_18] : memref<72x512xf32, #tpu.memory_space<vmem>>, vector<4x512xf32>
    tpu.vector_store %arg11[%c40, %c0_18], %29 {strides = array<i32>} : memref<72x512xf32, #tpu.memory_space<vmem>>, vector<4x512xf32>,
    %c497_i32 = arith.constant 497 : i32
    %31 = tpu.dynamic_rotate %4 by %c497_i32 dim 1 : vector<4x512xf32>, i32 -> vector<4x512xf32>
    %c6 = arith.constant 6 : index
    %c0_19 = arith.constant 0 : index
    %32 = vector.load %arg4[%c6, %c0_19] : memref<9x512xf32, #tpu.memory_space<vmem>>, vector<1x512xf32>
    %33 = vector.broadcast %32 : vector<1x512xf32> to vector<4x512xf32>
    %34 = arith.mulf %31, %33 : vector<4x512xf32>
    %c48 = arith.constant 48 : index
    %c0_20 = arith.constant 0 : index
    %35 = vector.load %arg11[%c48, %c0_20] : memref<72x512xf32, #tpu.memory_space<vmem>>, vector<4x512xf32>
    tpu.vector_store %arg11[%c48, %c0_20], %34 {strides = array<i32>} : memref<72x512xf32, #tpu.memory_space<vmem>>, vector<4x512xf32>,
    %c496_i32 = arith.constant 496 : i32
    %36 = tpu.dynamic_rotate %4 by %c496_i32 dim 1 : vector<4x512xf32>, i32 -> vector<4x512xf32>
    %c7 = arith.constant 7 : index
    %c0_21 = arith.constant 0 : index
    %37 = vector.load %arg4[%c7, %c0_21] : memref<9x512xf32, #tpu.memory_space<vmem>>, vector<1x512xf32>
    %38 = vector.broadcast %37 : vector<1x512xf32> to vector<4x512xf32>
    %39 = arith.mulf %36, %38 : vector<4x512xf32>
    %c56 = arith.constant 56 : index
    %c0_22 = arith.constant 0 : index
    %40 = vector.load %arg11[%c56, %c0_22] : memref<72x512xf32, #tpu.memory_space<vmem>>, vector<4x512xf32>
    tpu.vector_store %arg11[%c56, %c0_22], %39 {strides = array<i32>} : memref<72x512xf32, #tpu.memory_space<vmem>>, vector<4x512xf32>,
    %c495_i32 = arith.constant 495 : i32
    %41 = tpu.dynamic_rotate %4 by %c495_i32 dim 1 : vector<4x512xf32>, i32 -> vector<4x512xf32>
    %c8_23 = arith.constant 8 : index
    %c0_24 = arith.constant 0 : index
    %42 = vector.load %arg4[%c8_23, %c0_24] : memref<9x512xf32, #tpu.memory_space<vmem>>, vector<1x512xf32>
    %43 = vector.broadcast %42 : vector<1x512xf32> to vector<4x512xf32>
    %44 = arith.mulf %41, %43 : vector<4x512xf32>
    %c64 = arith.constant 64 : index
    %c0_25 = arith.constant 0 : index
    %45 = vector.load %arg11[%c64, %c0_25] : memref<72x512xf32, #tpu.memory_space<vmem>>, vector<4x512xf32>
    tpu.vector_store %arg11[%c64, %c0_25], %44 {strides = array<i32>} : memref<72x512xf32, #tpu.memory_space<vmem>>, vector<4x512xf32>,
    %c0_26 = arith.constant 0 : index
    %c0_27 = arith.constant 0 : index
    %46 = vector.load %arg2[%c0_26, %c0_27] : memref<4x72xf32, #tpu.memory_space<vmem>>, vector<4x72xf32>
    %c0_28 = arith.constant 0 : index
    %c0_29 = arith.constant 0 : index
    %47 = vector.load %arg11[%c0_28, %c0_29] : memref<72x512xf32, #tpu.memory_space<vmem>>, vector<72x512xf32>
    %cst_30 = arith.constant dense<0.000000e+00> : vector<4x512xf32>
    %48 = tpu.matmul %46, %47, %cst_30 {dimension_numbers = #tpu.dot_dimension_numbers<[1], [0], [0], [1], [0, 0, 1, 1], [], []>} : vector<4x72xf32>, vector<72x512xf32>, vector<4x512xf32> -> vector<4x512xf32>
    %cst_31 = arith.constant 0.000000e+00 : f32
    %49 = vector.broadcast %cst_31 : f32 to vector<4x512xf32>
    %50 = arith.maximumf %48, %49 : vector<4x512xf32>
    %51 = vector.shape_cast %50 : vector<4x512xf32> to vector<4x2x256xf32>
    %52 = tpu.transpose %51, [1, 0, 2] : vector<4x2x256xf32> -> vector<2x4x256xf32>
    %53 = vector.shape_cast %52 : vector<2x4x256xf32> to vector<2x1024xf32>
    %c17_i32_32 = arith.constant 17 : i32
    %54 = tpu.dynamic_rotate %53 by %c17_i32_32 dim 1 : vector<2x1024xf32>, i32 -> vector<2x1024xf32>
    %c0_33 = arith.constant 0 : index
    %c0_34 = arith.constant 0 : index
    %55 = vector.load %arg5[%c0_33, %c0_34] : memref<9x1024xf32, #tpu.memory_space<vmem>>, vector<1x1024xf32>
    %56 = vector.broadcast %55 : vector<1x1024xf32> to vector<2x1024xf32>
    %57 = arith.mulf %54, %56 : vector<2x1024xf32>
    %c0_35 = arith.constant 0 : index
    %c0_36 = arith.constant 0 : index
    %58 = vector.load %arg12[%c0_35, %c0_36] : memref<72x1024xf32, #tpu.memory_space<vmem>>, vector<2x1024xf32>
    tpu.vector_store %arg12[%c0_35, %c0_36], %57 {strides = array<i32>} : memref<72x1024xf32, #tpu.memory_space<vmem>>, vector<2x1024xf32>,
    %c16_i32_37 = arith.constant 16 : i32
    %59 = tpu.dynamic_rotate %53 by %c16_i32_37 dim 1 : vector<2x1024xf32>, i32 -> vector<2x1024xf32>
    %c1_38 = arith.constant 1 : index
    %c0_39 = arith.constant 0 : index
    %60 = vector.load %arg5[%c1_38, %c0_39] : memref<9x1024xf32, #tpu.memory_space<vmem>>, vector<1x1024xf32>
    %61 = vector.broadcast %60 : vector<1x1024xf32> to vector<2x1024xf32>
    %62 = arith.mulf %59, %61 : vector<2x1024xf32>
    %c8_40 = arith.constant 8 : index
    %c0_41 = arith.constant 0 : index
    %63 = vector.load %arg12[%c8_40, %c0_41] : memref<72x1024xf32, #tpu.memory_space<vmem>>, vector<2x1024xf32>
    tpu.vector_store %arg12[%c8_40, %c0_41], %62 {strides = array<i32>} : memref<72x1024xf32, #tpu.memory_space<vmem>>, vector<2x1024xf32>,
    %c15_i32_42 = arith.constant 15 : i32
    %64 = tpu.dynamic_rotate %53 by %c15_i32_42 dim 1 : vector<2x1024xf32>, i32 -> vector<2x1024xf32>
    %c2_43 = arith.constant 2 : index
    %c0_44 = arith.constant 0 : index
    %65 = vector.load %arg5[%c2_43, %c0_44] : memref<9x1024xf32, #tpu.memory_space<vmem>>, vector<1x1024xf32>
    %66 = vector.broadcast %65 : vector<1x1024xf32> to vector<2x1024xf32>
    %67 = arith.mulf %64, %66 : vector<2x1024xf32>
    %c16_45 = arith.constant 16 : index
    %c0_46 = arith.constant 0 : index
    %68 = vector.load %arg12[%c16_45, %c0_46] : memref<72x1024xf32, #tpu.memory_space<vmem>>, vector<2x1024xf32>
    tpu.vector_store %arg12[%c16_45, %c0_46], %67 {strides = array<i32>} : memref<72x1024xf32, #tpu.memory_space<vmem>>, vector<2x1024xf32>,
    %c1_i32_47 = arith.constant 1 : i32
    %69 = tpu.dynamic_rotate %53 by %c1_i32_47 dim 1 : vector<2x1024xf32>, i32 -> vector<2x1024xf32>
    %c3_48 = arith.constant 3 : index
    %c0_49 = arith.constant 0 : index
    %70 = vector.load %arg5[%c3_48, %c0_49] : memref<9x1024xf32, #tpu.memory_space<vmem>>, vector<1x1024xf32>
    %71 = vector.broadcast %70 : vector<1x1024xf32> to vector<2x1024xf32>
    %72 = arith.mulf %69, %71 : vector<2x1024xf32>
    %c24_50 = arith.constant 24 : index
    %c0_51 = arith.constant 0 : index
    %73 = vector.load %arg12[%c24_50, %c0_51] : memref<72x1024xf32, #tpu.memory_space<vmem>>, vector<2x1024xf32>
    tpu.vector_store %arg12[%c24_50, %c0_51], %72 {strides = array<i32>} : memref<72x1024xf32, #tpu.memory_space<vmem>>, vector<2x1024xf32>,
    %c32_52 = arith.constant 32 : index
    %c0_53 = arith.constant 0 : index
    %74 = vector.load %arg12[%c32_52, %c0_53] : memref<72x1024xf32, #tpu.memory_space<vmem>>, vector<2x1024xf32>
    tpu.vector_store %arg12[%c32_52, %c0_53], %53 {strides = array<i32>} : memref<72x1024xf32, #tpu.memory_space<vmem>>, vector<2x1024xf32>,
    %c1023_i32 = arith.constant 1023 : i32
    %75 = tpu.dynamic_rotate %53 by %c1023_i32 dim 1 : vector<2x1024xf32>, i32 -> vector<2x1024xf32>
    %c5_54 = arith.constant 5 : index
    %c0_55 = arith.constant 0 : index
    %76 = vector.load %arg5[%c5_54, %c0_55] : memref<9x1024xf32, #tpu.memory_space<vmem>>, vector<1x1024xf32>
    %77 = vector.broadcast %76 : vector<1x1024xf32> to vector<2x1024xf32>
    %78 = arith.mulf %75, %77 : vector<2x1024xf32>
    %c40_56 = arith.constant 40 : index
    %c0_57 = arith.constant 0 : index
    %79 = vector.load %arg12[%c40_56, %c0_57] : memref<72x1024xf32, #tpu.memory_space<vmem>>, vector<2x1024xf32>
    tpu.vector_store %arg12[%c40_56, %c0_57], %78 {strides = array<i32>} : memref<72x1024xf32, #tpu.memory_space<vmem>>, vector<2x1024xf32>,
    %c1009_i32 = arith.constant 1009 : i32
    %80 = tpu.dynamic_rotate %53 by %c1009_i32 dim 1 : vector<2x1024xf32>, i32 -> vector<2x1024xf32>
    %c6_58 = arith.constant 6 : index
    %c0_59 = arith.constant 0 : index
    %81 = vector.load %arg5[%c6_58, %c0_59] : memref<9x1024xf32, #tpu.memory_space<vmem>>, vector<1x1024xf32>
    %82 = vector.broadcast %81 : vector<1x1024xf32> to vector<2x1024xf32>
    %83 = arith.mulf %80, %82 : vector<2x1024xf32>
    %c48_60 = arith.constant 48 : index
    %c0_61 = arith.constant 0 : index
    %84 = vector.load %arg12[%c48_60, %c0_61] : memref<72x1024xf32, #tpu.memory_space<vmem>>, vector<2x1024xf32>
    tpu.vector_store %arg12[%c48_60, %c0_61], %83 {strides = array<i32>} : memref<72x1024xf32, #tpu.memory_space<vmem>>, vector<2x1024xf32>,
    %c1008_i32 = arith.constant 1008 : i32
    %85 = tpu.dynamic_rotate %53 by %c1008_i32 dim 1 : vector<2x1024xf32>, i32 -> vector<2x1024xf32>
    %c7_62 = arith.constant 7 : index
    %c0_63 = arith.constant 0 : index
    %86 = vector.load %arg5[%c7_62, %c0_63] : memref<9x1024xf32, #tpu.memory_space<vmem>>, vector<1x1024xf32>
    %87 = vector.broadcast %86 : vector<1x1024xf32> to vector<2x1024xf32>
    %88 = arith.mulf %85, %87 : vector<2x1024xf32>
    %c56_64 = arith.constant 56 : index
    %c0_65 = arith.constant 0 : index
    %89 = vector.load %arg12[%c56_64, %c0_65] : memref<72x1024xf32, #tpu.memory_space<vmem>>, vector<2x1024xf32>
    tpu.vector_store %arg12[%c56_64, %c0_65], %88 {strides = array<i32>} : memref<72x1024xf32, #tpu.memory_space<vmem>>, vector<2x1024xf32>,
    %c1007_i32 = arith.constant 1007 : i32
    %90 = tpu.dynamic_rotate %53 by %c1007_i32 dim 1 : vector<2x1024xf32>, i32 -> vector<2x1024xf32>
    %c8_66 = arith.constant 8 : index
    %c0_67 = arith.constant 0 : index
    %91 = vector.load %arg5[%c8_66, %c0_67] : memref<9x1024xf32, #tpu.memory_space<vmem>>, vector<1x1024xf32>
    %92 = vector.broadcast %91 : vector<1x1024xf32> to vector<2x1024xf32>
    %93 = arith.mulf %90, %92 : vector<2x1024xf32>
    %c64_68 = arith.constant 64 : index
    %c0_69 = arith.constant 0 : index
    %94 = vector.load %arg12[%c64_68, %c0_69] : memref<72x1024xf32, #tpu.memory_space<vmem>>, vector<2x1024xf32>
    tpu.vector_store %arg12[%c64_68, %c0_69], %93 {strides = array<i32>} : memref<72x1024xf32, #tpu.memory_space<vmem>>, vector<2x1024xf32>,
    %c0_70 = arith.constant 0 : index
    %c0_71 = arith.constant 0 : index
    %95 = vector.load %arg3[%c0_70, %c0_71] : memref<2x72xf32, #tpu.memory_space<vmem>>, vector<2x72xf32>
    %c0_72 = arith.constant 0 : index
    %c0_73 = arith.constant 0 : index
    %96 = vector.load %arg12[%c0_72, %c0_73] : memref<72x1024xf32, #tpu.memory_space<vmem>>, vector<72x1024xf32>
    %cst_74 = arith.constant dense<0.000000e+00> : vector<2x1024xf32>
    %97 = tpu.matmul %95, %96, %cst_74 {dimension_numbers = #tpu.dot_dimension_numbers<[1], [0], [0], [1], [0, 0, 1, 1], [], []>} : vector<2x72xf32>, vector<72x1024xf32>, vector<2x1024xf32> -> vector<2x1024xf32>
    %cst_75 = arith.constant 0.000000e+00 : f32
    %98 = vector.broadcast %cst_75 : f32 to vector<2x1024xf32>
    %99 = arith.maximumf %97, %98 : vector<2x1024xf32>
    %100 = vector.shape_cast %99 : vector<2x1024xf32> to vector<2x4x256xf32>
    %cst_76 = arith.constant dense<0.000000e+00> : vector<2x4xf32>
    %101 = vector.multi_reduction <add>, %100, %cst_76 [2] : vector<2x4x256xf32> to vector<2x4xf32>
    %cst_77 = arith.constant 3.906250e-03 : f32
    %102 = vector.broadcast %cst_77 : f32 to vector<2x4xf32>
    %103 = arith.mulf %101, %102 : vector<2x4xf32>
    %104 = tpu.transpose %103, [1, 0] : vector<2x4xf32> -> vector<4x2xf32>
    %c0_78 = arith.constant 0 : index
    %c0_79 = arith.constant 0 : index
    %105 = vector.load %arg6[%c0_78, %c0_79] : memref<2x2xf32, #tpu.memory_space<vmem>>, vector<2x2xf32>
    %cst_80 = arith.constant dense<0.000000e+00> : vector<4x2xf32>
    %106 = tpu.matmul %104, %105, %cst_80 {dimension_numbers = #tpu.dot_dimension_numbers<[1], [0], [0], [1], [0, 0, 1, 1], [], []>} : vector<4x2xf32>, vector<2x2xf32>, vector<4x2xf32> -> vector<4x2xf32>
    %c0_81 = arith.constant 0 : index
    %c0_82 = arith.constant 0 : index
    %107 = vector.load %arg7[%c0_81, %c0_82] : memref<1x2xf32, #tpu.memory_space<vmem>>, vector<1x2xf32>
    %108 = vector.broadcast %107 : vector<1x2xf32> to vector<4x2xf32>
    %109 = arith.addf %106, %108 : vector<4x2xf32>
    %110 = tpu.iota {dimensions = array<i32: 1>} : vector<4x2xi32>
    %cst_83 = arith.constant dense<0xFF800000> : vector<4xf32>
    %111 = vector.multi_reduction <maximumf>, %109, %cst_83 [1] : vector<4x2xf32> to vector<4xf32>
    %112 = vector.shape_cast %111 : vector<4xf32> to vector<4x1xf32>
    %113 = vector.broadcast %112 : vector<4x1xf32> to vector<4x2xf32>
    %114 = arith.cmpf oeq, %109, %113 : vector<4x2xf32>
    %c2_i32 = arith.constant 2 : i32
    %115 = vector.broadcast %c2_i32 : i32 to vector<4x2xi32>
    %116 = arith.subi %115, %110 : vector<4x2xi32>
    %c0_i32 = arith.constant 0 : i32
    %117 = vector.broadcast %c0_i32 : i32 to vector<4x2xi32>
    %118 = arith.select %114, %116, %117 : vector<4x2xi1>, vector<4x2xi32>
    %cst_84 = arith.constant dense<-2147483648> : vector<4xi32>
    %119 = vector.multi_reduction <maxsi>, %118, %cst_84 [1] : vector<4x2xi32> to vector<4xi32>
    %120 = vector.shape_cast %119 : vector<4xi32> to vector<4x1xi32>
    %121 = vector.broadcast %120 : vector<4x1xi32> to vector<4x2xi32>
    %122 = arith.cmpi eq, %118, %121 : vector<4x2xi32>
    %cst_85 = arith.constant 1.000000e+00 : f32
    %cst_86 = arith.constant 0.000000e+00 : f32
    %123 = vector.broadcast %cst_85 : f32 to vector<4x2xf32>
    %124 = vector.broadcast %cst_86 : f32 to vector<4x2xf32>
    %125 = arith.select %122, %123, %124 : vector<4x2xi1>, vector<4x2xf32>
    %cst_87 = arith.constant dense<0.000000e+00> : vector<4xf32>
    %126 = vector.multi_reduction <add>, %4, %cst_87 [1] : vector<4x512xf32> to vector<4xf32>
    %127 = vector.shape_cast %126 : vector<4xf32> to vector<4x1xf32>
    %cst_88 = arith.constant dense<0.000000e+00> : vector<2xf32>
    %128 = vector.multi_reduction <add>, %125, %cst_88 [0] : vector<4x2xf32> to vector<2xf32>
    %129 = vector.shape_cast %128 : vector<2xf32> to vector<1x2xf32>
    %cst_89 = arith.constant 5.120000e+02 : f32
    %130 = vector.broadcast %cst_89 : f32 to vector<1x2xf32>
    %131 = arith.mulf %129, %130 : vector<1x2xf32>
    %132 = vector.broadcast %127 : vector<4x1xf32> to vector<4x2xf32>
    %133 = arith.mulf %125, %132 : vector<4x2xf32>
    %cst_90 = arith.constant dense<0.000000e+00> : vector<2xf32>
    %134 = vector.multi_reduction <add>, %133, %cst_90 [0] : vector<4x2xf32> to vector<2xf32>
    %135 = vector.shape_cast %134 : vector<2xf32> to vector<1x2xf32>
    %cst_91 = arith.constant 1.000000e+00 : f32
    %136 = vector.broadcast %cst_91 : f32 to vector<1x2xf32>
    %137 = arith.maximumf %131, %136 : vector<1x2xf32>
    %138 = arith.divf %135, %137 : vector<1x2xf32>
    %139 = vector.broadcast %138 : vector<1x2xf32> to vector<4x2xf32>
    %140 = arith.mulf %125, %139 : vector<4x2xf32>
    %cst_92 = arith.constant dense<0.000000e+00> : vector<4xf32>
    %141 = vector.multi_reduction <add>, %140, %cst_92 [1] : vector<4x2xf32> to vector<4xf32>
    %142 = vector.shape_cast %141 : vector<4xf32> to vector<4x1xf32>
    %143 = vector.broadcast %142 : vector<4x1xf32> to vector<4x512xf32>
    %144 = arith.subf %4, %143 : vector<4x512xf32>
    %145 = arith.mulf %144, %144 : vector<4x512xf32>
    %cst_93 = arith.constant dense<0.000000e+00> : vector<4xf32>
    %146 = vector.multi_reduction <add>, %145, %cst_93 [1] : vector<4x512xf32> to vector<4xf32>
    %147 = vector.shape_cast %146 : vector<4xf32> to vector<4x1xf32>
    %148 = vector.broadcast %147 : vector<4x1xf32> to vector<4x2xf32>
    %149 = arith.mulf %125, %148 : vector<4x2xf32>
    %cst_94 = arith.constant dense<0.000000e+00> : vector<2xf32>
    %150 = vector.multi_reduction <add>, %149, %cst_94 [0] : vector<4x2xf32> to vector<2xf32>
    %151 = vector.shape_cast %150 : vector<2xf32> to vector<1x2xf32>
    %cst_95 = arith.constant 1.000000e+00 : f32
    %152 = vector.broadcast %cst_95 : f32 to vector<1x2xf32>
    %153 = arith.subf %131, %152 : vector<1x2xf32>
    %cst_96 = arith.constant 1.000000e+00 : f32
    %154 = vector.broadcast %cst_96 : f32 to vector<1x2xf32>
    %155 = arith.maximumf %153, %154 : vector<1x2xf32>
    %156 = arith.divf %151, %155 : vector<1x2xf32>
    %cst_97 = arith.constant 9.99999974E-6 : f32
    %157 = vector.broadcast %cst_97 : f32 to vector<1x2xf32>
    %158 = arith.addf %156, %157 : vector<1x2xf32>
    %159 = math.rsqrt %158 : vector<1x2xf32>
    %160 = vector.broadcast %159 : vector<1x2xf32> to vector<4x2xf32>
    %161 = arith.mulf %125, %160 : vector<4x2xf32>
    %cst_98 = arith.constant dense<0.000000e+00> : vector<4xf32>
    %162 = vector.multi_reduction <add>, %161, %cst_98 [1] : vector<4x2xf32> to vector<4xf32>
    %163 = vector.shape_cast %162 : vector<4xf32> to vector<4x1xf32>
    %c0_99 = arith.constant 0 : index
    %c0_100 = arith.constant 0 : index
    %164 = vector.load %arg8[%c0_99, %c0_100] : memref<4x1xf32, #tpu.memory_space<vmem>>, vector<4x1xf32>
    %165 = arith.mulf %164, %163 : vector<4x1xf32>
    %166 = vector.broadcast %165 : vector<4x1xf32> to vector<4x512xf32>
    %167 = arith.mulf %144, %166 : vector<4x512xf32>
    %c0_101 = arith.constant 0 : index
    %c0_102 = arith.constant 0 : index
    %168 = vector.load %arg9[%c0_101, %c0_102] : memref<4x1xf32, #tpu.memory_space<vmem>>, vector<4x1xf32>
    %169 = vector.broadcast %168 : vector<4x1xf32> to vector<4x512xf32>
    %170 = arith.addf %167, %169 : vector<4x512xf32>
    %c0_103 = arith.constant 0 : index
    %c0_104 = arith.constant 0 : index
    %171 = vector.load %arg10[%c0_103, %c0_104] : memref<4x512xf32, #tpu.memory_space<vmem>>, vector<4x512xf32>
    tpu.vector_store %arg10[%c0_103, %c0_104], %170 {strides = array<i32>} : memref<4x512xf32, #tpu.memory_space<vmem>>, vector<4x512xf32>,
    return
  }
  func.func @transform_0(%arg0: i32) -> (i32, i32) {
    %c0_i32 = arith.constant 0 : i32
    %c0_i32_0 = arith.constant 0 : i32
    %c0_i32_1 = arith.constant 0 : i32
    return %c0_i32, %c0_i32_0 : i32, i32
  }
  func.func @transform_1(%arg0: i32) -> (i32, i32) {
    %c0_i32 = arith.constant 0 : i32
    %c0_i32_0 = arith.constant 0 : i32
    %c0_i32_1 = arith.constant 0 : i32
    return %c0_i32, %c0_i32_0 : i32, i32
  }
  func.func @transform_2(%arg0: i32) -> (i32, i32) {
    %c0_i32 = arith.constant 0 : i32
    %c0_i32_0 = arith.constant 0 : i32
    %c0_i32_1 = arith.constant 0 : i32
    return %c0_i32, %c0_i32_0 : i32, i32
  }
  func.func @transform_3(%arg0: i32) -> (i32, i32) {
    %c0_i32 = arith.constant 0 : i32
    %c0_i32_0 = arith.constant 0 : i32
    %c0_i32_1 = arith.constant 0 : i32
    return %c0_i32, %c0_i32_0 : i32, i32
  }
  func.func @transform_4(%arg0: i32) -> (i32, i32) {
    %c0_i32 = arith.constant 0 : i32
    %c0_i32_0 = arith.constant 0 : i32
    %c0_i32_1 = arith.constant 0 : i32
    return %c0_i32, %c0_i32_0 : i32, i32
  }
  func.func @transform_5(%arg0: i32) -> (i32, i32) {
    %c0_i32 = arith.constant 0 : i32
    %c0_i32_0 = arith.constant 0 : i32
    %c0_i32_1 = arith.constant 0 : i32
    return %c0_i32, %c0_i32_0 : i32, i32
  }
  func.func @transform_6(%arg0: i32) -> (i32, i32) {
    %c0_i32 = arith.constant 0 : i32
    %c0_i32_0 = arith.constant 0 : i32
    %c0_i32_1 = arith.constant 0 : i32
    return %c0_i32, %c0_i32_0 : i32, i32
  }
  func.func @transform_7(%arg0: i32) -> (i32, i32) {
    %c0_i32 = arith.constant 0 : i32
    %c0_i32_0 = arith.constant 0 : i32
    %c0_i32_1 = arith.constant 0 : i32
    return %c0_i32, %c0_i32_0 : i32, i32
  }
  func.func @transform_8(%arg0: i32) -> (i32, i32) {
    %c0_i32 = arith.constant 0 : i32
    %c0_i32_0 = arith.constant 0 : i32
    %c0_i32_1 = arith.constant 0 : i32
    return %c0_i32, %c0_i32_0 : i32, i32
  }
  func.func @transform_9(%arg0: i32) -> (i32, i32) {
    %c0_i32 = arith.constant 0 : i32
    %c0_i32_0 = arith.constant 0 : i32
    %c0_i32_1 = arith.constant 0 : i32
    return %c0_i32, %c0_i32_0 : i32, i32
  }
}

</mosaic_0001>

<llo_original>
// kernel: tpu_custom_call.1
$region0: #{tpu_custom_call.1}
  #allocation0 [shape = 'u32[]', space=smem, size = 0x4, offset = 0x4, fixed_abs, tag = 'smem constant byte address 0x4 - core index']
  #allocation1 [shape = 'u32[144,128]{1,0:T(1,128)}', space=vmem, size = 0x12000, scoped, tag = 'internal scratch']
  #allocation2 [shape = 'f32[72,512]{1,0:T(8,128)}', space=vmem, size = 0x24000, scoped, tag = 'scratch operand']
  #allocation3 [shape = 'f32[72,1024]{1,0:T(8,128)}', space=vmem, size = 0x48000, scoped, tag = 'scratch operand']
  %s0 = inlined_call_operand.hbm [shape: f32[4,512], index: 0, kind: input, shape index: {}]
  %s1 = inlined_call_operand.vmem [shape: f32[4,72], index: 1, kind: input, shape index: {}]
  %s2 = inlined_call_operand.vmem [shape: f32[2,72], index: 2, kind: input, shape index: {}]
  %s3 = inlined_call_operand.hbm [shape: f32[9,512], index: 3, kind: input, shape index: {}]
  %s4 = inlined_call_operand.hbm [shape: f32[9,1024], index: 4, kind: input, shape index: {}]
  %s5 = inlined_call_operand.vmem [shape: f32[2,2], index: 5, kind: input, shape index: {}]
  %s6 = inlined_call_operand.vmem [shape: f32[1,2], index: 6, kind: input, shape index: {}]
  %s7 = inlined_call_operand.vmem [shape: f32[4,1], index: 7, kind: input, shape index: {}]
  %s8 = inlined_call_operand.vmem [shape: f32[4,1], index: 8, kind: input, shape index: {}]
  %s9 = inlined_call_operand.hbm [shape: f32[4,512], index: 9, kind: output, shape index: {}]
  %s10 = sld [smem:[#allocation0]]
  $region58: #{tpu_custom_call.1} parent=0
    _
  %s12 = ssub.s32 1, %s10
  %s13 = scalar_select 0, %s12, %s10
  $region1: #{tpu_custom_call.1} parent=0
    #allocation4 [shape = 'u8[8192]{0}', space=vmem, size = 0x2000, scoped, tag = 'input window, operand 0, single buffered']
    #allocation5 [shape = 's32[1]{0}', space=sflag, size = 0x4, scoped, tag = 'scoped memory for tpu_custom_call.1']
    #allocation6 [shape = 's32[1]{0}', space=sflag, size = 0x4, scoped, tag = 'scoped memory for tpu_custom_call.1']
    #allocation7 [shape = 'u8[32768]{0}', space=vmem, size = 0x8000, scoped, tag = 'input window, operand 3, single buffered']
    #allocation8 [shape = 's32[1]{0}', space=sflag, size = 0x4, scoped, tag = 'scoped memory for tpu_custom_call.1']
    #allocation9 [shape = 'u8[65536]{0}', space=vmem, size = 0x10000, scoped, tag = 'input window, operand 4, single buffered']
    #allocation10 [shape = 'u8[8192]{0}', space=vmem, size = 0x2000, scoped, tag = 'output window, operand 0, single buffered']
    %14 = vsyncpa [#allocation5], 0
    %15 = vsyncpa [#allocation8], 0
    %16 = vsyncpa [#allocation6], 0
    // Predicated region
    $region2: #{tpu_custom_call.1} parent=1 // pred_check
      _
    $region3: #{tpu_custom_call.1} parent=1 // pred_check_branch
      %18 = sbr.rel (0) target = $region5
    $region4: #{tpu_custom_call.1} parent=1 // pred_region
      %s20 = ssub.s32 256, 256
      %21 = vsyncadd [#allocation5], %s20
      %s23 = sshll.u32 [#allocation4], 4
      %s24 = int_to_ptr.vmem [resolvable:$true] %s23
      %26 = dma.hbm_to_vmem [thread:$0]  %s0, 256, %s24, [#allocation5]
    $region5: #{tpu_custom_call.1} parent=1 // pred_fallthru
      _
    // Predicated region
    $region6: #{tpu_custom_call.1} parent=1 // pred_check
      _
    $region7: #{tpu_custom_call.1} parent=1 // pred_check_branch
      %28 = sbr.rel (0) target = $region9
    $region8: #{tpu_custom_call.1} parent=1 // pred_region
      _
    $region9: #{tpu_custom_call.1} parent=1 // pred_fallthru
      _
    // Predicated region
    $region10: #{tpu_custom_call.1} parent=1 // pred_check
      _
    $region11: #{tpu_custom_call.1} parent=1 // pred_check_branch
      %30 = sbr.rel (0) target = $region13
    $region12: #{tpu_custom_call.1} parent=1 // pred_region
      _
    $region13: #{tpu_custom_call.1} parent=1 // pred_fallthru
      _
    // Predicated region
    $region14: #{tpu_custom_call.1} parent=1 // pred_check
      _
    $region15: #{tpu_custom_call.1} parent=1 // pred_check_branch
      %32 = sbr.rel (0) target = $region17
    $region16: #{tpu_custom_call.1} parent=1 // pred_region
      %s34 = ssub.s32 1024, 1024
      %35 = vsyncadd [#allocation8], %s34
      %s36 = sshll.u32 [#allocation7], 4
      %s37 = int_to_ptr.vmem [resolvable:$true] %s36
      %42 = dma.hbm_to_vmem [thread:$0]  %s3, 1024, %s37, [#allocation8], 512, 512, 32
    $region17: #{tpu_custom_call.1} parent=1 // pred_fallthru
      _
    // Predicated region
    $region18: #{tpu_custom_call.1} parent=1 // pred_check
      _
    $region19: #{tpu_custom_call.1} parent=1 // pred_check_branch
      %44 = sbr.rel (0) target = $region21
    $region20: #{tpu_custom_call.1} parent=1 // pred_region
      %s46 = ssub.s32 2048, 2048
      %47 = vsyncadd [#allocation8], %s46
      %s48 = sshll.u32 [#allocation9], 4
      %s49 = int_to_ptr.vmem [resolvable:$true] %s48
      %54 = dma.hbm_to_vmem [thread:$0]  %s4, 2048, %s49, [#allocation8], 1024, 1024, 64
    $region21: #{tpu_custom_call.1} parent=1 // pred_fallthru
      _
    // Predicated region
    $region22: #{tpu_custom_call.1} parent=1 // pred_check
      _
    $region23: #{tpu_custom_call.1} parent=1 // pred_check_branch
      %56 = sbr.rel (0) target = $region25
    $region24: #{tpu_custom_call.1} parent=1 // pred_region
      _
    $region25: #{tpu_custom_call.1} parent=1 // pred_fallthru
      _
    // Predicated region
    $region26: #{tpu_custom_call.1} parent=1 // pred_check
      _
    $region27: #{tpu_custom_call.1} parent=1 // pred_check_branch
      %58 = sbr.rel (0) target = $region29
    $region28: #{tpu_custom_call.1} parent=1 // pred_region
      _
    $region29: #{tpu_custom_call.1} parent=1 // pred_fallthru
      _
    // Predicated region
    $region30: #{tpu_custom_call.1} parent=1 // pred_check
      _
    $region31: #{tpu_custom_call.1} parent=1 // pred_check_branch
      %60 = sbr.rel (0) target = $region33
    $region32: #{tpu_custom_call.1} parent=1 // pred_region
      _
    $region33: #{tpu_custom_call.1} parent=1 // pred_fallthru
      _
    // Predicated region
    $region34: #{tpu_custom_call.1} parent=1 // pred_check
      _
    $region35: #{tpu_custom_call.1} parent=1 // pred_check_branch
      %62 = sbr.rel (0) target = $region37
    $region36: #{tpu_custom_call.1} parent=1 // pred_region
      _
    $region37: #{tpu_custom_call.1} parent=1 // pred_fallthru
      _
    // Predicated region
    $region38: #{tpu_custom_call.1} parent=1 // pred_check
      _
    $region39: #{tpu_custom_call.1} parent=1 // pred_check_branch
      %64 = sbr.rel (0) target = $region41
    $region40: #{tpu_custom_call.1} parent=1 // pred_region
      %65 = dma.done [#allocation5], 256
    $region41: #{tpu_custom_call.1} parent=1 // pred_fallthru
      _
    // Predicated region
    $region42: #{tpu_custom_call.1} parent=1 // pred_check
      _
    $region43: #{tpu_custom_call.1} parent=1 // pred_check_branch
      %67 = sbr.rel (0) target = $region45
    $region44: #{tpu_custom_call.1} parent=1 // pred_region
      %68 = dma.done [#allocation8], 1024
    $region45: #{tpu_custom_call.1} parent=1 // pred_fallthru
      _
    // Predicated region
    $region46: #{tpu_custom_call.1} parent=1 // pred_check
      _
    $region47: #{tpu_custom_call.1} parent=1 // pred_check_branch
      %70 = sbr.rel (0) target = $region49
    $region48: #{tpu_custom_call.1} parent=1 // pred_region
      %71 = dma.done [#allocation8], 2048
    $region49: #{tpu_custom_call.1} parent=1 // pred_fallthru
      _
    %72 = vst [vmem:[#allocation2] sm:$0xff] 0.0
    %73 = vst [vmem:[#allocation2 + $0x8] sm:$0xff] 0.0
    %74 = vst [vmem:[#allocation2 + $0x10] sm:$0xff] 0.0
    %75 = vst [vmem:[#allocation2 + $0x18] sm:$0xff] 0.0
    %76 = vst [vmem:[#allocation2 + $0x20] sm:$0xff] 0.0
    %77 = vst [vmem:[#allocation2 + $0x28] sm:$0xff] 0.0
    %78 = vst [vmem:[#allocation2 + $0x30] sm:$0xff] 0.0
    %79 = vst [vmem:[#allocation2 + $0x38] sm:$0xff] 0.0
    %80 = vst [vmem:[#allocation2 + $0x40] sm:$0xff] 0.0
    %81 = vst [vmem:[#allocation2 + $0x48] sm:$0xff] 0.0
    %82 = vst [vmem:[#allocation2 + $0x50] sm:$0xff] 0.0
    %83 = vst [vmem:[#allocation2 + $0x58] sm:$0xff] 0.0
    %84 = vst [vmem:[#allocation2 + $0x60] sm:$0xff] 0.0
    %85 = vst [vmem:[#allocation2 + $0x68] sm:$0xff] 0.0
    %86 = vst [vmem:[#allocation2 + $0x70] sm:$0xff] 0.0
    %87 = vst [vmem:[#allocation2 + $0x78] sm:$0xff] 0.0
    %88 = vst [vmem:[#allocation2 + $0x80] sm:$0xff] 0.0
    %89 = vst [vmem:[#allocation2 + $0x88] sm:$0xff] 0.0
    %90 = vst [vmem:[#allocation2 + $0x90] sm:$0xff] 0.0
    %91 = vst [vmem:[#allocation2 + $0x98] sm:$0xff] 0.0
    %92 = vst [vmem:[#allocation2 + $0xa0] sm:$0xff] 0.0
    %93 = vst [vmem:[#allocation2 + $0xa8] sm:$0xff] 0.0
    %94 = vst [vmem:[#allocation2 + $0xb0] sm:$0xff] 0.0
    %95 = vst [vmem:[#allocation2 + $0xb8] sm:$0xff] 0.0
    %96 = vst [vmem:[#allocation2 + $0xc0] sm:$0xff] 0.0
    %97 = vst [vmem:[#allocation2 + $0xc8] sm:$0xff] 0.0
    %98 = vst [vmem:[#allocation2 + $0xd0] sm:$0xff] 0.0
    %99 = vst [vmem:[#allocation2 + $0xd8] sm:$0xff] 0.0
    %100 = vst [vmem:[#allocation2 + $0xe0] sm:$0xff] 0.0
    %101 = vst [vmem:[#allocation2 + $0xe8] sm:$0xff] 0.0
    %102 = vst [vmem:[#allocation2 + $0xf0] sm:$0xff] 0.0
    %103 = vst [vmem:[#allocation2 + $0xf8] sm:$0xff] 0.0
    %104 = vst [vmem:[#allocation2 + $0x100] sm:$0xff] 0.0
    %105 = vst [vmem:[#allocation2 + $0x108] sm:$0xff] 0.0
    %106 = vst [vmem:[#allocation2 + $0x110] sm:$0xff] 0.0
    %107 = vst [vmem:[#allocation2 + $0x118] sm:$0xff] 0.0
    %108 = vst [vmem:[#allocation3] sm:$0xff] 0.0
    %109 = vst [vmem:[#allocation3 + $0x8] sm:$0xff] 0.0
    %110 = vst [vmem:[#allocation3 + $0x10] sm:$0xff] 0.0
    %111 = vst [vmem:[#allocation3 + $0x18] sm:$0xff] 0.0
    %112 = vst [vmem:[#allocation3 + $0x20] sm:$0xff] 0.0
    %113 = vst [vmem:[#allocation3 + $0x28] sm:$0xff] 0.0
    %114 = vst [vmem:[#allocation3 + $0x30] sm:$0xff] 0.0
    %115 = vst [vmem:[#allocation3 + $0x38] sm:$0xff] 0.0
    %116 = vst [vmem:[#allocation3 + $0x40] sm:$0xff] 0.0
    %117 = vst [vmem:[#allocation3 + $0x48] sm:$0xff] 0.0
    %118 = vst [vmem:[#allocation3 + $0x50] sm:$0xff] 0.0
    %119 = vst [vmem:[#allocation3 + $0x58] sm:$0xff] 0.0
    %120 = vst [vmem:[#allocation3 + $0x60] sm:$0xff] 0.0
    %121 = vst [vmem:[#allocation3 + $0x68] sm:$0xff] 0.0
    %122 = vst [vmem:[#allocation3 + $0x70] sm:$0xff] 0.0
    %123 = vst [vmem:[#allocation3 + $0x78] sm:$0xff] 0.0
    %124 = vst [vmem:[#allocation3 + $0x80] sm:$0xff] 0.0
    %125 = vst [vmem:[#allocation3 + $0x88] sm:$0xff] 0.0
    %126 = vst [vmem:[#allocation3 + $0x90] sm:$0xff] 0.0
    %127 = vst [vmem:[#allocation3 + $0x98] sm:$0xff] 0.0
    %128 = vst [vmem:[#allocation3 + $0xa0] sm:$0xff] 0.0
    %129 = vst [vmem:[#allocation3 + $0xa8] sm:$0xff] 0.0
    %130 = vst [vmem:[#allocation3 + $0xb0] sm:$0xff] 0.0
    %131 = vst [vmem:[#allocation3 + $0xb8] sm:$0xff] 0.0
    %132 = vst [vmem:[#allocation3 + $0xc0] sm:$0xff] 0.0
    %133 = vst [vmem:[#allocation3 + $0xc8] sm:$0xff] 0.0
    %134 = vst [vmem:[#allocation3 + $0xd0] sm:$0xff] 0.0
    %135 = vst [vmem:[#allocation3 + $0xd8] sm:$0xff] 0.0
    %136 = vst [vmem:[#allocation3 + $0xe0] sm:$0xff] 0.0
    %137 = vst [vmem:[#allocation3 + $0xe8] sm:$0xff] 0.0
    %138 = vst [vmem:[#allocation3 + $0xf0] sm:$0xff] 0.0
    %139 = vst [vmem:[#allocation3 + $0xf8] sm:$0xff] 0.0
    %140 = vst [vmem:[#allocation3 + $0x100] sm:$0xff] 0.0
    %141 = vst [vmem:[#allocation3 + $0x108] sm:$0xff] 0.0
    %142 = vst [vmem:[#allocation3 + $0x110] sm:$0xff] 0.0
    %143 = vst [vmem:[#allocation3 + $0x118] sm:$0xff] 0.0
    %144 = vst [vmem:[#allocation3 + $0x120] sm:$0xff] 0.0
    %145 = vst [vmem:[#allocation3 + $0x128] sm:$0xff] 0.0
    %146 = vst [vmem:[#allocation3 + $0x130] sm:$0xff] 0.0
    %147 = vst [vmem:[#allocation3 + $0x138] sm:$0xff] 0.0
    %148 = vst [vmem:[#allocation3 + $0x140] sm:$0xff] 0.0
    %149 = vst [vmem:[#allocation3 + $0x148] sm:$0xff] 0.0
    %150 = vst [vmem:[#allocation3 + $0x150] sm:$0xff] 0.0
    %151 = vst [vmem:[#allocation3 + $0x158] sm:$0xff] 0.0
    %152 = vst [vmem:[#allocation3 + $0x160] sm:$0xff] 0.0
    %153 = vst [vmem:[#allocation3 + $0x168] sm:$0xff] 0.0
    %154 = vst [vmem:[#allocation3 + $0x170] sm:$0xff] 0.0
    %155 = vst [vmem:[#allocation3 + $0x178] sm:$0xff] 0.0
    %156 = vst [vmem:[#allocation3 + $0x180] sm:$0xff] 0.0
    %157 = vst [vmem:[#allocation3 + $0x188] sm:$0xff] 0.0
    %158 = vst [vmem:[#allocation3 + $0x190] sm:$0xff] 0.0
    %159 = vst [vmem:[#allocation3 + $0x198] sm:$0xff] 0.0
    %160 = vst [vmem:[#allocation3 + $0x1a0] sm:$0xff] 0.0
    %161 = vst [vmem:[#allocation3 + $0x1a8] sm:$0xff] 0.0
    %162 = vst [vmem:[#allocation3 + $0x1b0] sm:$0xff] 0.0
    %163 = vst [vmem:[#allocation3 + $0x1b8] sm:$0xff] 0.0
    %164 = vst [vmem:[#allocation3 + $0x1c0] sm:$0xff] 0.0
    %165 = vst [vmem:[#allocation3 + $0x1c8] sm:$0xff] 0.0
    %166 = vst [vmem:[#allocation3 + $0x1d0] sm:$0xff] 0.0
    %167 = vst [vmem:[#allocation3 + $0x1d8] sm:$0xff] 0.0
    %168 = vst [vmem:[#allocation3 + $0x1e0] sm:$0xff] 0.0
    %169 = vst [vmem:[#allocation3 + $0x1e8] sm:$0xff] 0.0
    %170 = vst [vmem:[#allocation3 + $0x1f0] sm:$0xff] 0.0
    %171 = vst [vmem:[#allocation3 + $0x1f8] sm:$0xff] 0.0
    %172 = vst [vmem:[#allocation3 + $0x200] sm:$0xff] 0.0
    %173 = vst [vmem:[#allocation3 + $0x208] sm:$0xff] 0.0
    %174 = vst [vmem:[#allocation3 + $0x210] sm:$0xff] 0.0
    %175 = vst [vmem:[#allocation3 + $0x218] sm:$0xff] 0.0
    %176 = vst [vmem:[#allocation3 + $0x220] sm:$0xff] 0.0
    %177 = vst [vmem:[#allocation3 + $0x228] sm:$0xff] 0.0
    %178 = vst [vmem:[#allocation3 + $0x230] sm:$0xff] 0.0
    %179 = vst [vmem:[#allocation3 + $0x238] sm:$0xff] 0.0
    %v180 = vld [vmem:[#allocation4] sm:$0xff]
    %v181 = vld [vmem:[#allocation4 + $0x8] sm:$0xff]
    %v184 = vcombine.high %v180, %v180
    %v185 = vcombine.high %v181, %v181
    %188 = vrot.lane.b32.xlu0 %v180, 17
    %v189 = vpop.permute.xlu0 %188
    %190 = vrot.lane.b32.xlu0 %v184, 17
    %v191 = vpop.permute.xlu0 %190
    %192 = vrot.lane.b32.xlu0 %v181, 17
    %v193 = vpop.permute.xlu0 %192
    %194 = vrot.lane.b32.xlu0 %v185, 17
    %v195 = vpop.permute.xlu0 %194
    %v196 = vlaneseq
    %v197 = vand.u32 %v196, 127
    %vm198 = vcmp.lt.s32.totalorder %v197, 17
    %v199 = vsel %vm198, %v193, %v195
    %v200 = vsel %vm198, %v191, %v193
    %v201 = vsel %vm198, %v189, %v191
    %v202 = vsel %vm198, %v195, %v189
    %v203 = vld [vmem:[#allocation7] ss:$8 sm:$0xf]
    %v205 = vlaneseq
    %v206 = vshrl.u32 %v205, 7
    %v207 = vsub.s32 0, %v206
    %v208 = vrot.slane %v203, %v207
    %v209 = vlaneseq
    %v210 = vshrl.u32 %v209, 7
    %v211 = vsub.s32 1, %v210
    %v212 = vrot.slane %v203, %v211
    %v213 = vlaneseq
    %v214 = vshrl.u32 %v213, 7
    %v215 = vsub.s32 2, %v214
    %v216 = vrot.slane %v203, %v215
    %v217 = vlaneseq
    %v218 = vshrl.u32 %v217, 7
    %v219 = vsub.s32 3, %v218
    %v220 = vrot.slane %v203, %v219
    %v225 = vmul.f32 %v202, %v208
    %v226 = vmul.f32 %v201, %v212
    %v227 = vmul.f32 %v200, %v216
    %v228 = vmul.f32 %v199, %v220
    %229 = vst [vmem:[#allocation2] sm:$0xf] %v225
    %230 = vst [vmem:[#allocation2 + $0x8] sm:$0xf] %v226
    %231 = vst [vmem:[#allocation2 + $0x10] sm:$0xf] %v227
    %232 = vst [vmem:[#allocation2 + $0x18] sm:$0xf] %v228
    %233 = vrot.lane.b32.xlu0 %v180, 16
    %v234 = vpop.permute.xlu0 %233
    %235 = vrot.lane.b32.xlu0 %v184, 16
    %v236 = vpop.permute.xlu0 %235
    %237 = vrot.lane.b32.xlu0 %v181, 16
    %v238 = vpop.permute.xlu0 %237
    %239 = vrot.lane.b32.xlu0 %v185, 16
    %v240 = vpop.permute.xlu0 %239
    %vm241 = vcmp.lt.s32.totalorder %v197, 16
    %v242 = vsel %vm241, %v238, %v240
    %v243 = vsel %vm241, %v236, %v238
    %v244 = vsel %vm241, %v234, %v236
    %v245 = vsel %vm241, %v240, %v234
    %s246 = scalar_lea.vmem [#allocation7], 1
    %v247 = vld [vmem:[%s246] ss:$8 sm:$0xf]
    %v249 = vlaneseq
    %v250 = vshrl.u32 %v249, 7
    %v251 = vsub.s32 0, %v250
    %v252 = vrot.slane %v247, %v251
    %v253 = vlaneseq
    %v254 = vshrl.u32 %v253, 7
    %v255 = vsub.s32 1, %v254
    %v256 = vrot.slane %v247, %v255
    %v257 = vlaneseq
    %v258 = vshrl.u32 %v257, 7
    %v259 = vsub.s32 2, %v258
    %v260 = vrot.slane %v247, %v259
    %v261 = vlaneseq
    %v262 = vshrl.u32 %v261, 7
    %v263 = vsub.s32 3, %v262
    %v264 = vrot.slane %v247, %v263
    %v269 = vmul.f32 %v245, %v252
    %v270 = vmul.f32 %v244, %v256
    %v271 = vmul.f32 %v243, %v260
    %v272 = vmul.f32 %v242, %v264
    %273 = vst [vmem:[#allocation2 + $0x20] sm:$0xf] %v269
    %274 = vst [vmem:[#allocation2 + $0x28] sm:$0xf] %v270
    %275 = vst [vmem:[#allocation2 + $0x30] sm:$0xf] %v271
    %276 = vst [vmem:[#allocation2 + $0x38] sm:$0xf] %v272
    %277 = vrot.lane.b32.xlu0 %v180, 15
    %v278 = vpop.permute.xlu0 %277
    %279 = vrot.lane.b32.xlu0 %v184, 15
    %v280 = vpop.permute.xlu0 %279
    %281 = vrot.lane.b32.xlu0 %v181, 15
    %v282 = vpop.permute.xlu0 %281
    %283 = vrot.lane.b32.xlu0 %v185, 15
    %v284 = vpop.permute.xlu0 %283
    %vm285 = vcmp.lt.s32.totalorder %v197, 15
    %v286 = vsel %vm285, %v282, %v284
    %v287 = vsel %vm285, %v280, %v282
    %v288 = vsel %vm285, %v278, %v280
    %v289 = vsel %vm285, %v284, %v278
    %s290 = scalar_lea.vmem [#allocation7], 2
    %v291 = vld [vmem:[%s290] ss:$8 sm:$0xf]
    %v293 = vlaneseq
    %v294 = vshrl.u32 %v293, 7
    %v295 = vsub.s32 0, %v294
    %v296 = vrot.slane %v291, %v295
    %v297 = vlaneseq
    %v298 = vshrl.u32 %v297, 7
    %v299 = vsub.s32 1, %v298
    %v300 = vrot.slane %v291, %v299
    %v301 = vlaneseq
    %v302 = vshrl.u32 %v301, 7
    %v303 = vsub.s32 2, %v302
    %v304 = vrot.slane %v291, %v303
    %v305 = vlaneseq
    %v306 = vshrl.u32 %v305, 7
    %v307 = vsub.s32 3, %v306
    %v308 = vrot.slane %v291, %v307
    %v313 = vmul.f32 %v289, %v296
    %v314 = vmul.f32 %v288, %v300
    %v315 = vmul.f32 %v287, %v304
    %v316 = vmul.f32 %v286, %v308
    %317 = vst [vmem:[#allocation2 + $0x40] sm:$0xf] %v313
    %318 = vst [vmem:[#allocation2 + $0x48] sm:$0xf] %v314
    %319 = vst [vmem:[#allocation2 + $0x50] sm:$0xf] %v315
    %320 = vst [vmem:[#allocation2 + $0x58] sm:$0xf] %v316
    %321 = vrot.lane.b32.xlu0 %v180, 1
    %v322 = vpop.permute.xlu0 %321
    %323 = vrot.lane.b32.xlu0 %v184, 1
    %v324 = vpop.permute.xlu0 %323
    %325 = vrot.lane.b32.xlu0 %v181, 1
    %v326 = vpop.permute.xlu0 %325
    %327 = vrot.lane.b32.xlu0 %v185, 1
    %v328 = vpop.permute.xlu0 %327
    %vm329 = vcmp.lt.s32.totalorder %v197, 1
    %v330 = vsel %vm329, %v326, %v328
    %v331 = vsel %vm329, %v324, %v326
    %v332 = vsel %vm329, %v322, %v324
    %v333 = vsel %vm329, %v328, %v322
    %s334 = scalar_lea.vmem [#allocation7], 3
    %v335 = vld [vmem:[%s334] ss:$8 sm:$0xf]
    %v337 = vlaneseq
    %v338 = vshrl.u32 %v337, 7
    %v339 = vsub.s32 0, %v338
    %v340 = vrot.slane %v335, %v339
    %v341 = vlaneseq
    %v342 = vshrl.u32 %v341, 7
    %v343 = vsub.s32 1, %v342
    %v344 = vrot.slane %v335, %v343
    %v345 = vlaneseq
    %v346 = vshrl.u32 %v345, 7
    %v347 = vsub.s32 2, %v346
    %v348 = vrot.slane %v335, %v347
    %v349 = vlaneseq
    %v350 = vshrl.u32 %v349, 7
    %v351 = vsub.s32 3, %v350
    %v352 = vrot.slane %v335, %v351
    %v357 = vmul.f32 %v333, %v340
    %v358 = vmul.f32 %v332, %v344
    %v359 = vmul.f32 %v331, %v348
    %v360 = vmul.f32 %v330, %v352
    %361 = vst [vmem:[#allocation2 + $0x60] sm:$0xf] %v357
    %362 = vst [vmem:[#allocation2 + $0x68] sm:$0xf] %v358
    %363 = vst [vmem:[#allocation2 + $0x70] sm:$0xf] %v359
    %364 = vst [vmem:[#allocation2 + $0x78] sm:$0xf] %v360
    %365 = vst [vmem:[#allocation2 + $0x80] sm:$0xf] %v180
    %366 = vst [vmem:[#allocation2 + $0x88] sm:$0xf] %v184
    %367 = vst [vmem:[#allocation2 + $0x90] sm:$0xf] %v181
    %368 = vst [vmem:[#allocation2 + $0x98] sm:$0xf] %v185
    %369 = vrot.lane.b32.xlu0 %v180, 127
    %v370 = vpop.permute.xlu0 %369
    %371 = vrot.lane.b32.xlu0 %v184, 127
    %v372 = vpop.permute.xlu0 %371
    %373 = vrot.lane.b32.xlu0 %v181, 127
    %v374 = vpop.permute.xlu0 %373
    %375 = vrot.lane.b32.xlu0 %v185, 127
    %v376 = vpop.permute.xlu0 %375
    %vm377 = vcmp.lt.s32.totalorder %v197, 127
    %v378 = vsel %vm377, %v374, %v376
    %v379 = vsel %vm377, %v372, %v374
    %v380 = vsel %vm377, %v370, %v372
    %v381 = vsel %vm377, %v376, %v370
    %s382 = scalar_lea.vmem [#allocation7], 5
    %v383 = vld [vmem:[%s382] ss:$8 sm:$0xf]
    %v385 = vlaneseq
    %v386 = vshrl.u32 %v385, 7
    %v387 = vsub.s32 0, %v386
    %v388 = vrot.slane %v383, %v387
    %v389 = vlaneseq
    %v390 = vshrl.u32 %v389, 7
    %v391 = vsub.s32 1, %v390
    %v392 = vrot.slane %v383, %v391
    %v393 = vlaneseq
    %v394 = vshrl.u32 %v393, 7
    %v395 = vsub.s32 2, %v394
    %v396 = vrot.slane %v383, %v395
    %v397 = vlaneseq
    %v398 = vshrl.u32 %v397, 7
    %v399 = vsub.s32 3, %v398
    %v400 = vrot.slane %v383, %v399
    %v405 = vmul.f32 %v380, %v388
    %v406 = vmul.f32 %v379, %v392
    %v407 = vmul.f32 %v378, %v396
    %v408 = vmul.f32 %v381, %v400
    %409 = vst [vmem:[#allocation2 + $0xa0] sm:$0xf] %v405
    %410 = vst [vmem:[#allocation2 + $0xa8] sm:$0xf] %v406
    %411 = vst [vmem:[#allocation2 + $0xb0] sm:$0xf] %v407
    %412 = vst [vmem:[#allocation2 + $0xb8] sm:$0xf] %v408
    %413 = vrot.lane.b32.xlu0 %v180, 113
    %v414 = vpop.permute.xlu0 %413
    %415 = vrot.lane.b32.xlu0 %v184, 113
    %v416 = vpop.permute.xlu0 %415
    %417 = vrot.lane.b32.xlu0 %v181, 113
    %v418 = vpop.permute.xlu0 %417
    %419 = vrot.lane.b32.xlu0 %v185, 113
    %v420 = vpop.permute.xlu0 %419
    %vm421 = vcmp.lt.s32.totalorder %v197, 113
    %v422 = vsel %vm421, %v418, %v420
    %v423 = vsel %vm421, %v416, %v418
    %v424 = vsel %vm421, %v414, %v416
    %v425 = vsel %vm421, %v420, %v414
    %s426 = scalar_lea.vmem [#allocation7], 6
    %v427 = vld [vmem:[%s426] ss:$8 sm:$0xf]
    %v429 = vlaneseq
    %v430 = vshrl.u32 %v429, 7
    %v431 = vsub.s32 0, %v430
    %v432 = vrot.slane %v427, %v431
    %v433 = vlaneseq
    %v434 = vshrl.u32 %v433, 7
    %v435 = vsub.s32 1, %v434
    %v436 = vrot.slane %v427, %v435
    %v437 = vlaneseq
    %v438 = vshrl.u32 %v437, 7
    %v439 = vsub.s32 2, %v438
    %v440 = vrot.slane %v427, %v439
    %v441 = vlaneseq
    %v442 = vshrl.u32 %v441, 7
    %v443 = vsub.s32 3, %v442
    %v444 = vrot.slane %v427, %v443
    %v449 = vmul.f32 %v424, %v432
    %v450 = vmul.f32 %v423, %v436
    %v451 = vmul.f32 %v422, %v440
    %v452 = vmul.f32 %v425, %v444
    %453 = vst [vmem:[#allocation2 + $0xc0] sm:$0xf] %v449
    %454 = vst [vmem:[#allocation2 + $0xc8] sm:$0xf] %v450
    %455 = vst [vmem:[#allocation2 + $0xd0] sm:$0xf] %v451
    %456 = vst [vmem:[#allocation2 + $0xd8] sm:$0xf] %v452
    %457 = vrot.lane.b32.xlu0 %v180, 112
    %v458 = vpop.permute.xlu0 %457
    %459 = vrot.lane.b32.xlu0 %v184, 112
    %v460 = vpop.permute.xlu0 %459
    %461 = vrot.lane.b32.xlu0 %v181, 112
    %v462 = vpop.permute.xlu0 %461
    %463 = vrot.lane.b32.xlu0 %v185, 112
    %v464 = vpop.permute.xlu0 %463
    %vm465 = vcmp.lt.s32.totalorder %v197, 112
    %v466 = vsel %vm465, %v462, %v464
    %v467 = vsel %vm465, %v460, %v462
    %v468 = vsel %vm465, %v458, %v460
    %v469 = vsel %vm465, %v464, %v458
    %s470 = scalar_lea.vmem [#allocation7], 7
    %v471 = vld [vmem:[%s470] ss:$8 sm:$0xf]
    %v473 = vlaneseq
    %v474 = vshrl.u32 %v473, 7
    %v475 = vsub.s32 0, %v474
    %v476 = vrot.slane %v471, %v475
    %v477 = vlaneseq
    %v478 = vshrl.u32 %v477, 7
    %v479 = vsub.s32 1, %v478
    %v480 = vrot.slane %v471, %v479
    %v481 = vlaneseq
    %v482 = vshrl.u32 %v481, 7
    %v483 = vsub.s32 2, %v482
    %v484 = vrot.slane %v471, %v483
    %v485 = vlaneseq
    %v486 = vshrl.u32 %v485, 7
    %v487 = vsub.s32 3, %v486
    %v488 = vrot.slane %v471, %v487
    %v493 = vmul.f32 %v468, %v476
    %v494 = vmul.f32 %v467, %v480
    %v495 = vmul.f32 %v466, %v484
    %v496 = vmul.f32 %v469, %v488
    %497 = vst [vmem:[#allocation2 + $0xe0] sm:$0xf] %v493
    %498 = vst [vmem:[#allocation2 + $0xe8] sm:$0xf] %v494
    %499 = vst [vmem:[#allocation2 + $0xf0] sm:$0xf] %v495
    %500 = vst [vmem:[#allocation2 + $0xf8] sm:$0xf] %v496
    %501 = vrot.lane.b32.xlu0 %v180, 111
    %v502 = vpop.permute.xlu0 %501
    %503 = vrot.lane.b32.xlu0 %v184, 111
    %v504 = vpop.permute.xlu0 %503
    %505 = vrot.lane.b32.xlu0 %v181, 111
    %v506 = vpop.permute.xlu0 %505
    %507 = vrot.lane.b32.xlu0 %v185, 111
    %v508 = vpop.permute.xlu0 %507
    %vm509 = vcmp.lt.s32.totalorder %v197, 111
    %v510 = vsel %vm509, %v506, %v508
    %v511 = vsel %vm509, %v504, %v506
    %v512 = vsel %vm509, %v502, %v504
    %v513 = vsel %vm509, %v508, %v502
    %s514 = scalar_lea.vmem [#allocation7], 32
    %v515 = vld [vmem:[%s514] ss:$8 sm:$0xf]
    %v517 = vlaneseq
    %v518 = vshrl.u32 %v517, 7
    %v519 = vsub.s32 0, %v518
    %v520 = vrot.slane %v515, %v519
    %v521 = vlaneseq
    %v522 = vshrl.u32 %v521, 7
    %v523 = vsub.s32 1, %v522
    %v524 = vrot.slane %v515, %v523
    %v525 = vlaneseq
    %v526 = vshrl.u32 %v525, 7
    %v527 = vsub.s32 2, %v526
    %v528 = vrot.slane %v515, %v527
    %v529 = vlaneseq
    %v530 = vshrl.u32 %v529, 7
    %v531 = vsub.s32 3, %v530
    %v532 = vrot.slane %v515, %v531
    %v537 = vmul.f32 %v512, %v520
    %v538 = vmul.f32 %v511, %v524
    %v539 = vmul.f32 %v510, %v528
    %v540 = vmul.f32 %v513, %v532
    %541 = vst [vmem:[#allocation2 + $0x100] sm:$0xf] %v537
    %542 = vst [vmem:[#allocation2 + $0x108] sm:$0xf] %v538
    %543 = vst [vmem:[#allocation2 + $0x110] sm:$0xf] %v539
    %544 = vst [vmem:[#allocation2 + $0x118] sm:$0xf] %v540
    %v545 = vld [vmem:[%s1] sm:$0xf]
    %v546 = vld [vmem:[#allocation2] sm:$0xff]
    %v547 = vld [vmem:[#allocation2 + $0x8] sm:$0xff]
    %v548 = vld [vmem:[#allocation2 + $0x10] sm:$0xff]
    %v549 = vld [vmem:[#allocation2 + $0x18] sm:$0xff]
    %v550 = vld [vmem:[#allocation2 + $0x20] sm:$0xff]
    %v551 = vld [vmem:[#allocation2 + $0x28] sm:$0xff]
    %v552 = vld [vmem:[#allocation2 + $0x30] sm:$0xff]
    %v553 = vld [vmem:[#allocation2 + $0x38] sm:$0xff]
    %v554 = vld [vmem:[#allocation2 + $0x40] sm:$0xff]
    %v555 = vld [vmem:[#allocation2 + $0x48] sm:$0xff]
    %v556 = vld [vmem:[#allocation2 + $0x50] sm:$0xff]
    %v557 = vld [vmem:[#allocation2 + $0x58] sm:$0xff]
    %v558 = vld [vmem:[#allocation2 + $0x60] sm:$0xff]
    %v559 = vld [vmem:[#allocation2 + $0x68] sm:$0xff]
    %v560 = vld [vmem:[#allocation2 + $0x70] sm:$0xff]
    %v561 = vld [vmem:[#allocation2 + $0x78] sm:$0xff]
    %v562 = vld [vmem:[#allocation2 + $0x80] sm:$0xff]
    %v563 = vld [vmem:[#allocation2 + $0x88] sm:$0xff]
    %v564 = vld [vmem:[#allocation2 + $0x90] sm:$0xff]
    %v565 = vld [vmem:[#allocation2 + $0x98] sm:$0xff]
    %v566 = vld [vmem:[#allocation2 + $0xa0] sm:$0xff]
    %v567 = vld [vmem:[#allocation2 + $0xa8] sm:$0xff]
    %v568 = vld [vmem:[#allocation2 + $0xb0] sm:$0xff]
    %v569 = vld [vmem:[#allocation2 + $0xb8] sm:$0xff]
    %v570 = vld [vmem:[#allocation2 + $0xc0] sm:$0xff]
    %v571 = vld [vmem:[#allocation2 + $0xc8] sm:$0xff]
    %v572 = vld [vmem:[#allocation2 + $0xd0] sm:$0xff]
    %v573 = vld [vmem:[#allocation2 + $0xd8] sm:$0xff]
    %v574 = vld [vmem:[#allocation2 + $0xe0] sm:$0xff]
    %v575 = vld [vmem:[#allocation2 + $0xe8] sm:$0xff]
    %v576 = vld [vmem:[#allocation2 + $0xf0] sm:$0xff]
    %v577 = vld [vmem:[#allocation2 + $0xf8] sm:$0xff]
    %v578 = vld [vmem:[#allocation2 + $0x100] sm:$0xff]
    %v579 = vld [vmem:[#allocation2 + $0x108] sm:$0xff]
    %v580 = vld [vmem:[#allocation2 + $0x110] sm:$0xff]
    %v581 = vld [vmem:[#allocation2 + $0x118] sm:$0xff]
    %vm582 = vcmask 588800
    %v584 = vsel %vm582, %v545, 0
    %586 = vmatprep.subr.mxu0 0.0
    %587 = vmatpush1.msra.mxu0 0.0
    %588 = vmatprep.subr.mxu0 0.0
    %589 = vmatpush1.msra.mxu0 0.0
    %590 = vmatprep.subr.mxu0 0.0
    %591 = vmatpush1.msra.mxu0 0.0
    %592 = vmatprep.subr.mxu0 0.0
    %593 = vmatpush1.msra.mxu0 0.0
    %594 = vmatprep.subr.mxu0 0.0
    %595 = vmatpush1.msra.mxu0 0.0
    %596 = vmatprep.subr.mxu0 0.0
    %597 = vmatpush1.msra.mxu0 0.0
    %598 = vmatprep.subr.mxu0 0.0
    %599 = vmatpush1.msra.mxu0 0.0
    %600 = vmatprep.subr.mxu0 %v579
    %601 = vmatpush1.msra.mxu0 %v578
    %602 = vmatprep.subr.mxu0 %v575
    %603 = vmatpush1.msra.mxu0 %v574
    %604 = vmatprep.subr.mxu0 %v571
    %605 = vmatpush1.msra.mxu0 %v570
    %606 = vmatprep.subr.mxu0 %v567
    %607 = vmatpush1.msra.mxu0 %v566
    %608 = vmatprep.subr.mxu0 %v563
    %609 = vmatpush1.msra.mxu0 %v562
    %610 = vmatprep.subr.mxu0 %v559
    %611 = vmatpush1.msra.mxu0 %v558
    %612 = vmatprep.subr.mxu0 %v555
    %613 = vmatpush1.msra.mxu0 %v554
    %614 = vmatprep.subr.mxu0 %v551
    %615 = vmatpush1.msra.mxu0 %v550
    %616 = vmatprep.subr.mxu0 %v547
    %617 = vmatpush1.msra.mxu0 %v546
    %618 = vmatprep.subr.mxu0 0.0
    %619 = vmatpush2.msra.mxu0 0.0
    %620 = vmatprep.subr.mxu0 0.0
    %621 = vmatpush2.msra.mxu0 0.0
    %622 = vmatprep.subr.mxu0 0.0
    %623 = vmatpush2.msra.mxu0 0.0
    %624 = vmatprep.subr.mxu0 0.0
    %625 = vmatpush2.msra.mxu0 0.0
    %626 = vmatprep.subr.mxu0 0.0
    %627 = vmatpush2.msra.mxu0 0.0
    %628 = vmatprep.subr.mxu0 0.0
    %629 = vmatpush2.msra.mxu0 0.0
    %630 = vmatprep.subr.mxu0 0.0
    %631 = vmatpush2.msra.mxu0 0.0
    %632 = vmatprep.subr.mxu0 0.0
    %633 = vmatpush2.msra.mxu0 0.0
    %634 = vmatprep.subr.mxu0 0.0
    %635 = vmatpush2.msra.mxu0 0.0
    %636 = vmatprep.subr.mxu0 0.0
    %637 = vmatpush2.msra.mxu0 0.0
    %638 = vmatprep.subr.mxu0 0.0
    %639 = vmatpush2.msra.mxu0 0.0
    %640 = vmatprep.subr.mxu0 0.0
    %641 = vmatpush2.msra.mxu0 0.0
    %642 = vmatprep.subr.mxu0 0.0
    %643 = vmatpush2.msra.mxu0 0.0
    %644 = vmatprep.subr.mxu0 0.0
    %645 = vmatpush2.msra.mxu0 0.0
    %646 = vmatprep.subr.mxu0 0.0
    %647 = vmatpush2.msra.mxu0 0.0
    %648 = vmatprep.subr.mxu0 0.0
    %649 = vmatpush2.msra.mxu0 0.0
    %650 = vmatprep.mubr.f32.mxu0 0.0
    %651 = vmatmul.mubr.f32.gmra.mxu0 %v584
    %v652 = vpop.f32.mrf.mxu0
    %v653 = vadd.f32 0.0, %v652
    %v654 = vpop.f32.mrf.mxu0
    %v655 = vadd.f32 0.0, %v654
    %656 = vdwg.mxu0
    %657 = vmatprep.subr.mxu0 0.0
    %658 = vmatpush1.msra.mxu0 0.0
    %659 = vmatprep.subr.mxu0 0.0
    %660 = vmatpush1.msra.mxu0 0.0
    %661 = vmatprep.subr.mxu0 0.0
    %662 = vmatpush1.msra.mxu0 0.0
    %663 = vmatprep.subr.mxu0 0.0
    %664 = vmatpush1.msra.mxu0 0.0
    %665 = vmatprep.subr.mxu0 0.0
    %666 = vmatpush1.msra.mxu0 0.0
    %667 = vmatprep.subr.mxu0 0.0
    %668 = vmatpush1.msra.mxu0 0.0
    %669 = vmatprep.subr.mxu0 0.0
    %670 = vmatpush1.msra.mxu0 0.0
    %671 = vmatprep.subr.mxu0 %v581
    %672 = vmatpush1.msra.mxu0 %v580
    %673 = vmatprep.subr.mxu0 %v577
    %674 = vmatpush1.msra.mxu0 %v576
    %675 = vmatprep.subr.mxu0 %v573
    %676 = vmatpush1.msra.mxu0 %v572
    %677 = vmatprep.subr.mxu0 %v569
    %678 = vmatpush1.msra.mxu0 %v568
    %679 = vmatprep.subr.mxu0 %v565
    %680 = vmatpush1.msra.mxu0 %v564
    %681 = vmatprep.subr.mxu0 %v561
    %682 = vmatpush1.msra.mxu0 %v560
    %683 = vmatprep.subr.mxu0 %v557
    %684 = vmatpush1.msra.mxu0 %v556
    %685 = vmatprep.subr.mxu0 %v553
    %686 = vmatpush1.msra.mxu0 %v552
    %687 = vmatprep.subr.mxu0 %v549
    %688 = vmatpush1.msra.mxu0 %v548
    %689 = vmatprep.subr.mxu0 0.0
    %690 = vmatpush2.msra.mxu0 0.0
    %691 = vmatprep.subr.mxu0 0.0
    %692 = vmatpush2.msra.mxu0 0.0
    %693 = vmatprep.subr.mxu0 0.0
    %694 = vmatpush2.msra.mxu0 0.0
    %695 = vmatprep.subr.mxu0 0.0
    %696 = vmatpush2.msra.mxu0 0.0
    %697 = vmatprep.subr.mxu0 0.0
    %698 = vmatpush2.msra.mxu0 0.0
    %699 = vmatprep.subr.mxu0 0.0
    %700 = vmatpush2.msra.mxu0 0.0
    %701 = vmatprep.subr.mxu0 0.0
    %702 = vmatpush2.msra.mxu0 0.0
    %703 = vmatprep.subr.mxu0 0.0
    %704 = vmatpush2.msra.mxu0 0.0
    %705 = vmatprep.subr.mxu0 0.0
    %706 = vmatpush2.msra.mxu0 0.0
    %707 = vmatprep.subr.mxu0 0.0
    %708 = vmatpush2.msra.mxu0 0.0
    %709 = vmatprep.subr.mxu0 0.0
    %710 = vmatpush2.msra.mxu0 0.0
    %711 = vmatprep.subr.mxu0 0.0
    %712 = vmatpush2.msra.mxu0 0.0
    %713 = vmatprep.subr.mxu0 0.0
    %714 = vmatpush2.msra.mxu0 0.0
    %715 = vmatprep.subr.mxu0 0.0
    %716 = vmatpush2.msra.mxu0 0.0
    %717 = vmatprep.subr.mxu0 0.0
    %718 = vmatpush2.msra.mxu0 0.0
    %719 = vmatprep.subr.mxu0 0.0
    %720 = vmatpush2.msra.mxu0 0.0
    %721 = vmatprep.mubr.f32.mxu0 0.0
    %722 = vmatmul.mubr.f32.gmra.mxu0 %v584
    %v723 = vpop.f32.mrf.mxu0
    %v724 = vadd.f32 0.0, %v723
    %v725 = vpop.f32.mrf.mxu0
    %v726 = vadd.f32 0.0, %v725
    %727 = vdwg.mxu0
    %v728 = vmax.f32 %v653, 0.0
    %v730 = vunpack.c.l.s4 1983009808
    %v731 = vunpack.c.0.s8 %v730
    %v732 = vlaneseq
    %v733 = vshrl.u32 %v732, 7
    %v734 = vsub.s32 %v731, %v733
    %v735 = vrot.slane %v728, %v734
    %v736 = vmax.f32 %v724, 0.0
    %v738 = vunpack.c.l.s4 1983009808
    %v739 = vunpack.c.0.s8 %v738
    %v740 = vlaneseq
    %v741 = vshrl.u32 %v740, 7
    %v742 = vsub.s32 %v739, %v741
    %v743 = vrot.slane %v736, %v742
    %v744 = vcombine.low %v735, %v743
    %v745 = vcombine.high %v735, %v743
    %v747 = vunpack.c.l.s4 1934713408
    %v748 = vunpack.c.0.s8 %v747
    %v749 = vlaneseq
    %v750 = vshrl.u32 %v749, 7
    %v751 = vsub.s32 %v748, %v750
    %v752 = vrot.slane %v744, %v751
    %v754 = vunpack.c.l.s4 1934713408
    %v755 = vunpack.c.0.s8 %v754
    %v756 = vlaneseq
    %v757 = vshrl.u32 %v756, 7
    %v758 = vsub.s32 %v755, %v757
    %v759 = vrot.slane %v745, %v758
    %v760 = vcombine.high %v752, 0.0
    %v761 = vcombine.high %v759, 0.0
    %v762 = vmax.f32 %v655, 0.0
    %v764 = vunpack.c.l.s4 1983009808
    %v765 = vunpack.c.0.s8 %v764
    %v766 = vlaneseq
    %v767 = vshrl.u32 %v766, 7
    %v768 = vsub.s32 %v765, %v767
    %v769 = vrot.slane %v762, %v768
    %v770 = vmax.f32 %v726, 0.0
    %v772 = vunpack.c.l.s4 1983009808
    %v773 = vunpack.c.0.s8 %v772
    %v774 = vlaneseq
    %v775 = vshrl.u32 %v774, 7
    %v776 = vsub.s32 %v773, %v775
    %v777 = vrot.slane %v770, %v776
    %v778 = vcombine.low %v769, %v777
    %v779 = vcombine.high %v769, %v777
    %v781 = vunpack.c.l.s4 1934713408
    %v782 = vunpack.c.0.s8 %v781
    %v783 = vlaneseq
    %v784 = vshrl.u32 %v783, 7
    %v785 = vsub.s32 %v782, %v784
    %v786 = vrot.slane %v778, %v785
    %v788 = vunpack.c.l.s4 1934713408
    %v789 = vunpack.c.0.s8 %v788
    %v790 = vlaneseq
    %v791 = vshrl.u32 %v790, 7
    %v792 = vsub.s32 %v789, %v791
    %v793 = vrot.slane %v779, %v792
    %v794 = vcombine.high %v786, 0.0
    %v795 = vcombine.high %v793, 0.0
    %v796 = vcombine.low %v752, %v759
    %v798 = vunpack.c.l.s4 1983009808
    %v799 = vunpack.c.0.s8 %v798
    %v800 = vlaneseq
    %v801 = vshrl.u32 %v800, 7
    %v802 = vsub.s32 %v799, %v801
    %v803 = vrot.slane %v796, %v802
    %v804 = vcombine.low %v760, %v761
    %v806 = vunpack.c.l.s4 1983009808
    %v807 = vunpack.c.0.s8 %v806
    %v808 = vlaneseq
    %v809 = vshrl.u32 %v808, 7
    %v810 = vsub.s32 %v807, %v809
    %v811 = vrot.slane %v804, %v810
    %v812 = vcombine.low %v803, %v811
    %v814 = vunpack.c.l.s4 1934713408
    %v815 = vunpack.c.0.s8 %v814
    %v816 = vlaneseq
    %v817 = vshrl.u32 %v816, 7
    %v818 = vsub.s32 %v815, %v817
    %v819 = vrot.slane %v812, %v818
    %v820 = vcombine.low %v786, %v793
    %v822 = vunpack.c.l.s4 1983009808
    %v823 = vunpack.c.0.s8 %v822
    %v824 = vlaneseq
    %v825 = vshrl.u32 %v824, 7
    %v826 = vsub.s32 %v823, %v825
    %v827 = vrot.slane %v820, %v826
    %v828 = vcombine.low %v794, %v795
    %v830 = vunpack.c.l.s4 1983009808
    %v831 = vunpack.c.0.s8 %v830
    %v832 = vlaneseq
    %v833 = vshrl.u32 %v832, 7
    %v834 = vsub.s32 %v831, %v833
    %v835 = vrot.slane %v828, %v834
    %v836 = vcombine.low %v827, %v835
    %v838 = vunpack.c.l.s4 1934713408
    %v839 = vunpack.c.0.s8 %v838
    %v840 = vlaneseq
    %v841 = vshrl.u32 %v840, 7
    %v842 = vsub.s32 %v839, %v841
    %v843 = vrot.slane %v836, %v842
    %v845 = vunpack.c.l.s4 1983009808
    %v846 = vunpack.c.0.s8 %v845
    %v847 = vlaneseq
    %v848 = vshrl.u32 %v847, 7
    %v849 = vsub.s32 %v846, %v848
    %v850 = vrot.slane %v819, %v849
    %v851 = vcombine.high %v819, 0.0
    %v853 = vunpack.c.l.s4 1983009808
    %v854 = vunpack.c.0.s8 %v853
    %v855 = vlaneseq
    %v856 = vshrl.u32 %v855, 7
    %v857 = vsub.s32 %v854, %v856
    %v858 = vrot.slane %v851, %v857
    %v859 = vcombine.low %v850, %v858
    %v860 = vcombine.high %v850, %v858
    %v862 = vunpack.c.l.s4 1934713408
    %v863 = vunpack.c.0.s8 %v862
    %v864 = vlaneseq
    %v865 = vshrl.u32 %v864, 7
    %v866 = vsub.s32 %v863, %v865
    %v867 = vrot.slane %v859, %v866
    %v869 = vunpack.c.l.s4 1934713408
    %v870 = vunpack.c.0.s8 %v869
    %v871 = vlaneseq
    %v872 = vshrl.u32 %v871, 7
    %v873 = vsub.s32 %v870, %v872
    %v874 = vrot.slane %v860, %v873
    %v875 = vcombine.high %v867, 0.0
    %v876 = vcombine.high %v874, 0.0
    %v878 = vunpack.c.l.s4 1983009808
    %v879 = vunpack.c.0.s8 %v878
    %v880 = vlaneseq
    %v881 = vshrl.u32 %v880, 7
    %v882 = vsub.s32 %v879, %v881
    %v883 = vrot.slane %v843, %v882
    %v884 = vcombine.high %v843, 0.0
    %v886 = vunpack.c.l.s4 1983009808
    %v887 = vunpack.c.0.s8 %v886
    %v888 = vlaneseq
    %v889 = vshrl.u32 %v888, 7
    %v890 = vsub.s32 %v887, %v889
    %v891 = vrot.slane %v884, %v890
    %v892 = vcombine.low %v883, %v891
    %v893 = vcombine.high %v883, %v891
    %v895 = vunpack.c.l.s4 1934713408
    %v896 = vunpack.c.0.s8 %v895
    %v897 = vlaneseq
    %v898 = vshrl.u32 %v897, 7
    %v899 = vsub.s32 %v896, %v898
    %v900 = vrot.slane %v892, %v899
    %v902 = vunpack.c.l.s4 1934713408
    %v903 = vunpack.c.0.s8 %v902
    %v904 = vlaneseq
    %v905 = vshrl.u32 %v904, 7
    %v906 = vsub.s32 %v903, %v905
    %v907 = vrot.slane %v893, %v906
    %v908 = vcombine.high %v900, 0.0
    %v909 = vcombine.high %v907, 0.0
    %910 = vrot.lane.b32.xlu0 %v867, 17
    %v911 = vpop.permute.xlu0 %910
    %912 = vrot.lane.b32.xlu0 %v900, 17
    %v913 = vpop.permute.xlu0 %912
    %914 = vrot.lane.b32.xlu0 %v875, 17
    %v915 = vpop.permute.xlu0 %914
    %916 = vrot.lane.b32.xlu0 %v908, 17
    %v917 = vpop.permute.xlu0 %916
    %918 = vrot.lane.b32.xlu0 %v874, 17
    %v919 = vpop.permute.xlu0 %918
    %920 = vrot.lane.b32.xlu0 %v907, 17
    %v921 = vpop.permute.xlu0 %920
    %922 = vrot.lane.b32.xlu0 %v876, 17
    %v923 = vpop.permute.xlu0 %922
    %924 = vrot.lane.b32.xlu0 %v909, 17
    %v925 = vpop.permute.xlu0 %924
    %v926 = vsel %vm198, %v923, %v925
    %v927 = vsel %vm198, %v921, %v923
    %v928 = vsel %vm198, %v919, %v921
    %v929 = vsel %vm198, %v917, %v919
    %v930 = vsel %vm198, %v915, %v917
    %v931 = vsel %vm198, %v913, %v915
    %v932 = vsel %vm198, %v911, %v913
    %v933 = vsel %vm198, %v925, %v911
    %v934 = vld [vmem:[#allocation9] ss:$8 sm:$0xf]
    %v935 = vld [vmem:[#allocation9] ss:$8 sm:$0xf0]
    %v936 = vor.u32 %v934, %v935
    %v938 = vlaneseq
    %v939 = vshrl.u32 %v938, 7
    %v940 = vsub.s32 0, %v939
    %v941 = vrot.slane %v936, %v940
    %v942 = vlaneseq
    %v943 = vshrl.u32 %v942, 7
    %v944 = vsub.s32 1, %v943
    %v945 = vrot.slane %v936, %v944
    %v946 = vlaneseq
    %v947 = vshrl.u32 %v946, 7
    %v948 = vsub.s32 2, %v947
    %v949 = vrot.slane %v936, %v948
    %v950 = vlaneseq
    %v951 = vshrl.u32 %v950, 7
    %v952 = vsub.s32 3, %v951
    %v953 = vrot.slane %v936, %v952
    %v954 = vlaneseq
    %v955 = vshrl.u32 %v954, 7
    %v956 = vsub.s32 4, %v955
    %v957 = vrot.slane %v936, %v956
    %v958 = vlaneseq
    %v959 = vshrl.u32 %v958, 7
    %v960 = vsub.s32 5, %v959
    %v961 = vrot.slane %v936, %v960
    %v962 = vlaneseq
    %v963 = vshrl.u32 %v962, 7
    %v964 = vsub.s32 6, %v963
    %v965 = vrot.slane %v936, %v964
    %v966 = vlaneseq
    %v967 = vshrl.u32 %v966, 7
    %v968 = vsub.s32 7, %v967
    %v969 = vrot.slane %v936, %v968
    %v978 = vmul.f32 %v933, %v941
    %v979 = vmul.f32 %v932, %v945
    %v980 = vmul.f32 %v931, %v949
    %v981 = vmul.f32 %v930, %v953
    %v982 = vmul.f32 %v929, %v957
    %v983 = vmul.f32 %v928, %v961
    %v984 = vmul.f32 %v927, %v965
    %v985 = vmul.f32 %v926, %v969
    %986 = vst [vmem:[#allocation3] sm:$0x3] %v978
    %987 = vst [vmem:[#allocation3 + $0x8] sm:$0x3] %v979
    %988 = vst [vmem:[#allocation3 + $0x10] sm:$0x3] %v980
    %989 = vst [vmem:[#allocation3 + $0x18] sm:$0x3] %v981
    %990 = vst [vmem:[#allocation3 + $0x20] sm:$0x3] %v982
    %991 = vst [vmem:[#allocation3 + $0x28] sm:$0x3] %v983
    %992 = vst [vmem:[#allocation3 + $0x30] sm:$0x3] %v984
    %993 = vst [vmem:[#allocation3 + $0x38] sm:$0x3] %v985
    %994 = vrot.lane.b32.xlu0 %v867, 16
    %v995 = vpop.permute.xlu0 %994
    %996 = vrot.lane.b32.xlu0 %v900, 16
    %v997 = vpop.permute.xlu0 %996
    %998 = vrot.lane.b32.xlu0 %v875, 16
    %v999 = vpop.permute.xlu0 %998
    %1000 = vrot.lane.b32.xlu0 %v908, 16
    %v1001 = vpop.permute.xlu0 %1000
    %1002 = vrot.lane.b32.xlu0 %v874, 16
    %v1003 = vpop.permute.xlu0 %1002
    %1004 = vrot.lane.b32.xlu0 %v907, 16
    %v1005 = vpop.permute.xlu0 %1004
    %1006 = vrot.lane.b32.xlu0 %v876, 16
    %v1007 = vpop.permute.xlu0 %1006
    %1008 = vrot.lane.b32.xlu0 %v909, 16
    %v1009 = vpop.permute.xlu0 %1008
    %v1010 = vsel %vm241, %v1007, %v1009
    %v1011 = vsel %vm241, %v1005, %v1007
    %v1012 = vsel %vm241, %v1003, %v1005
    %v1013 = vsel %vm241, %v1001, %v1003
    %v1014 = vsel %vm241, %v999, %v1001
    %v1015 = vsel %vm241, %v997, %v999
    %v1016 = vsel %vm241, %v995, %v997
    %v1017 = vsel %vm241, %v1009, %v995
    %s1018 = scalar_lea.vmem [#allocation9], 1
    %v1019 = vld [vmem:[%s1018] ss:$8 sm:$0xf]
    %v1020 = vld [vmem:[%s1018] ss:$8 sm:$0xf0]
    %v1021 = vor.u32 %v1019, %v1020
    %v1023 = vlaneseq
    %v1024 = vshrl.u32 %v1023, 7
    %v1025 = vsub.s32 0, %v1024
    %v1026 = vrot.slane %v1021, %v1025
    %v1027 = vlaneseq
    %v1028 = vshrl.u32 %v1027, 7
    %v1029 = vsub.s32 1, %v1028
    %v1030 = vrot.slane %v1021, %v1029
    %v1031 = vlaneseq
    %v1032 = vshrl.u32 %v1031, 7
    %v1033 = vsub.s32 2, %v1032
    %v1034 = vrot.slane %v1021, %v1033
    %v1035 = vlaneseq
    %v1036 = vshrl.u32 %v1035, 7
    %v1037 = vsub.s32 3, %v1036
    %v1038 = vrot.slane %v1021, %v1037
    %v1039 = vlaneseq
    %v1040 = vshrl.u32 %v1039, 7
    %v1041 = vsub.s32 4, %v1040
    %v1042 = vrot.slane %v1021, %v1041
    %v1043 = vlaneseq
    %v1044 = vshrl.u32 %v1043, 7
    %v1045 = vsub.s32 5, %v1044
    %v1046 = vrot.slane %v1021, %v1045
    %v1047 = vlaneseq
    %v1048 = vshrl.u32 %v1047, 7
    %v1049 = vsub.s32 6, %v1048
    %v1050 = vrot.slane %v1021, %v1049
    %v1051 = vlaneseq
    %v1052 = vshrl.u32 %v1051, 7
    %v1053 = vsub.s32 7, %v1052
    %v1054 = vrot.slane %v1021, %v1053
    %v1063 = vmul.f32 %v1017, %v1026
    %v1064 = vmul.f32 %v1016, %v1030
    %v1065 = vmul.f32 %v1015, %v1034
    %v1066 = vmul.f32 %v1014, %v1038
    %v1067 = vmul.f32 %v1013, %v1042
    %v1068 = vmul.f32 %v1012, %v1046
    %v1069 = vmul.f32 %v1011, %v1050
    %v1070 = vmul.f32 %v1010, %v1054
    %1071 = vst [vmem:[#allocation3 + $0x40] sm:$0x3] %v1063
    %1072 = vst [vmem:[#allocation3 + $0x48] sm:$0x3] %v1064
    %1073 = vst [vmem:[#allocation3 + $0x50] sm:$0x3] %v1065
    %1074 = vst [vmem:[#allocation3 + $0x58] sm:$0x3] %v1066
    %1075 = vst [vmem:[#allocation3 + $0x60] sm:$0x3] %v1067
    %1076 = vst [vmem:[#allocation3 + $0x68] sm:$0x3] %v1068
    %1077 = vst [vmem:[#allocation3 + $0x70] sm:$0x3] %v1069
    %1078 = vst [vmem:[#allocation3 + $0x78] sm:$0x3] %v1070
    %1079 = vrot.lane.b32.xlu0 %v867, 15
    %v1080 = vpop.permute.xlu0 %1079
    %1081 = vrot.lane.b32.xlu0 %v900, 15
    %v1082 = vpop.permute.xlu0 %1081
    %1083 = vrot.lane.b32.xlu0 %v875, 15
    %v1084 = vpop.permute.xlu0 %1083
    %1085 = vrot.lane.b32.xlu0 %v908, 15
    %v1086 = vpop.permute.xlu0 %1085
    %1087 = vrot.lane.b32.xlu0 %v874, 15
    %v1088 = vpop.permute.xlu0 %1087
    %1089 = vrot.lane.b32.xlu0 %v907, 15
    %v1090 = vpop.permute.xlu0 %1089
    %1091 = vrot.lane.b32.xlu0 %v876, 15
    %v1092 = vpop.permute.xlu0 %1091
    %1093 = vrot.lane.b32.xlu0 %v909, 15
    %v1094 = vpop.permute.xlu0 %1093
    %v1095 = vsel %vm285, %v1092, %v1094
    %v1096 = vsel %vm285, %v1090, %v1092
    %v1097 = vsel %vm285, %v1088, %v1090
    %v1098 = vsel %vm285, %v1086, %v1088
    %v1099 = vsel %vm285, %v1084, %v1086
    %v1100 = vsel %vm285, %v1082, %v1084
    %v1101 = vsel %vm285, %v1080, %v1082
    %v1102 = vsel %vm285, %v1094, %v1080
    %s1103 = scalar_lea.vmem [#allocation9], 2
    %v1104 = vld [vmem:[%s1103] ss:$8 sm:$0xf]
    %v1105 = vld [vmem:[%s1103] ss:$8 sm:$0xf0]
    %v1106 = vor.u32 %v1104, %v1105
    %v1108 = vlaneseq
    %v1109 = vshrl.u32 %v1108, 7
    %v1110 = vsub.s32 0, %v1109
    %v1111 = vrot.slane %v1106, %v1110
    %v1112 = vlaneseq
    %v1113 = vshrl.u32 %v1112, 7
    %v1114 = vsub.s32 1, %v1113
    %v1115 = vrot.slane %v1106, %v1114
    %v1116 = vlaneseq
    %v1117 = vshrl.u32 %v1116, 7
    %v1118 = vsub.s32 2, %v1117
    %v1119 = vrot.slane %v1106, %v1118
    %v1120 = vlaneseq
    %v1121 = vshrl.u32 %v1120, 7
    %v1122 = vsub.s32 3, %v1121
    %v1123 = vrot.slane %v1106, %v1122
    %v1124 = vlaneseq
    %v1125 = vshrl.u32 %v1124, 7
    %v1126 = vsub.s32 4, %v1125
    %v1127 = vrot.slane %v1106, %v1126
    %v1128 = vlaneseq
    %v1129 = vshrl.u32 %v1128, 7
    %v1130 = vsub.s32 5, %v1129
    %v1131 = vrot.slane %v1106, %v1130
    %v1132 = vlaneseq
    %v1133 = vshrl.u32 %v1132, 7
    %v1134 = vsub.s32 6, %v1133
    %v1135 = vrot.slane %v1106, %v1134
    %v1136 = vlaneseq
    %v1137 = vshrl.u32 %v1136, 7
    %v1138 = vsub.s32 7, %v1137
    %v1139 = vrot.slane %v1106, %v1138
    %v1148 = vmul.f32 %v1102, %v1111
    %v1149 = vmul.f32 %v1101, %v1115
    %v1150 = vmul.f32 %v1100, %v1119
    %v1151 = vmul.f32 %v1099, %v1123
    %v1152 = vmul.f32 %v1098, %v1127
    %v1153 = vmul.f32 %v1097, %v1131
    %v1154 = vmul.f32 %v1096, %v1135
    %v1155 = vmul.f32 %v1095, %v1139
    %1156 = vst [vmem:[#allocation3 + $0x80] sm:$0x3] %v1148
    %1157 = vst [vmem:[#allocation3 + $0x88] sm:$0x3] %v1149
    %1158 = vst [vmem:[#allocation3 + $0x90] sm:$0x3] %v1150
    %1159 = vst [vmem:[#allocation3 + $0x98] sm:$0x3] %v1151
    %1160 = vst [vmem:[#allocation3 + $0xa0] sm:$0x3] %v1152
    %1161 = vst [vmem:[#allocation3 + $0xa8] sm:$0x3] %v1153
    %1162 = vst [vmem:[#allocation3 + $0xb0] sm:$0x3] %v1154
    %1163 = vst [vmem:[#allocation3 + $0xb8] sm:$0x3] %v1155
    %1164 = vrot.lane.b32.xlu0 %v867, 1
    %v1165 = vpop.permute.xlu0 %1164
    %1166 = vrot.lane.b32.xlu0 %v900, 1
    %v1167 = vpop.permute.xlu0 %1166
    %1168 = vrot.lane.b32.xlu0 %v875, 1
    %v1169 = vpop.permute.xlu0 %1168
    %1170 = vrot.lane.b32.xlu0 %v908, 1
    %v1171 = vpop.permute.xlu0 %1170
    %1172 = vrot.lane.b32.xlu0 %v874, 1
    %v1173 = vpop.permute.xlu0 %1172
    %1174 = vrot.lane.b32.xlu0 %v907, 1
    %v1175 = vpop.permute.xlu0 %1174
    %1176 = vrot.lane.b32.xlu0 %v876, 1
    %v1177 = vpop.permute.xlu0 %1176
    %1178 = vrot.lane.b32.xlu0 %v909, 1
    %v1179 = vpop.permute.xlu0 %1178
    %v1180 = vsel %vm329, %v1177, %v1179
    %v1181 = vsel %vm329, %v1175, %v1177
    %v1182 = vsel %vm329, %v1173, %v1175
    %v1183 = vsel %vm329, %v1171, %v1173
    %v1184 = vsel %vm329, %v1169, %v1171
    %v1185 = vsel %vm329, %v1167, %v1169
    %v1186 = vsel %vm329, %v1165, %v1167
    %v1187 = vsel %vm329, %v1179, %v1165
    %s1188 = scalar_lea.vmem [#allocation9], 3
    %v1189 = vld [vmem:[%s1188] ss:$8 sm:$0xf]
    %v1190 = vld [vmem:[%s1188] ss:$8 sm:$0xf0]
    %v1191 = vor.u32 %v1189, %v1190
    %v1193 = vlaneseq
    %v1194 = vshrl.u32 %v1193, 7
    %v1195 = vsub.s32 0, %v1194
    %v1196 = vrot.slane %v1191, %v1195
    %v1197 = vlaneseq
    %v1198 = vshrl.u32 %v1197, 7
    %v1199 = vsub.s32 1, %v1198
    %v1200 = vrot.slane %v1191, %v1199
    %v1201 = vlaneseq
    %v1202 = vshrl.u32 %v1201, 7
    %v1203 = vsub.s32 2, %v1202
    %v1204 = vrot.slane %v1191, %v1203
    %v1205 = vlaneseq
    %v1206 = vshrl.u32 %v1205, 7
    %v1207 = vsub.s32 3, %v1206
    %v1208 = vrot.slane %v1191, %v1207
    %v1209 = vlaneseq
    %v1210 = vshrl.u32 %v1209, 7
    %v1211 = vsub.s32 4, %v1210
    %v1212 = vrot.slane %v1191, %v1211
    %v1213 = vlaneseq
    %v1214 = vshrl.u32 %v1213, 7
    %v1215 = vsub.s32 5, %v1214
    %v1216 = vrot.slane %v1191, %v1215
    %v1217 = vlaneseq
    %v1218 = vshrl.u32 %v1217, 7
    %v1219 = vsub.s32 6, %v1218
    %v1220 = vrot.slane %v1191, %v1219
    %v1221 = vlaneseq
    %v1222 = vshrl.u32 %v1221, 7
    %v1223 = vsub.s32 7, %v1222
    %v1224 = vrot.slane %v1191, %v1223
    %v1233 = vmul.f32 %v1187, %v1196
    %v1234 = vmul.f32 %v1186, %v1200
    %v1235 = vmul.f32 %v1185, %v1204
    %v1236 = vmul.f32 %v1184, %v1208
    %v1237 = vmul.f32 %v1183, %v1212
    %v1238 = vmul.f32 %v1182, %v1216
    %v1239 = vmul.f32 %v1181, %v1220
    %v1240 = vmul.f32 %v1180, %v1224
    %1241 = vst [vmem:[#allocation3 + $0xc0] sm:$0x3] %v1233
    %1242 = vst [vmem:[#allocation3 + $0xc8] sm:$0x3] %v1234
    %1243 = vst [vmem:[#allocation3 + $0xd0] sm:$0x3] %v1235
    %1244 = vst [vmem:[#allocation3 + $0xd8] sm:$0x3] %v1236
    %1245 = vst [vmem:[#allocation3 + $0xe0] sm:$0x3] %v1237
    %1246 = vst [vmem:[#allocation3 + $0xe8] sm:$0x3] %v1238
    %1247 = vst [vmem:[#allocation3 + $0xf0] sm:$0x3] %v1239
    %1248 = vst [vmem:[#allocation3 + $0xf8] sm:$0x3] %v1240
    %1249 = vst [vmem:[#allocation3 + $0x100] sm:$0x3] %v867
    %1250 = vst [vmem:[#allocation3 + $0x108] sm:$0x3] %v900
    %1251 = vst [vmem:[#allocation3 + $0x110] sm:$0x3] %v875
    %1252 = vst [vmem:[#allocation3 + $0x118] sm:$0x3] %v908
    %1253 = vst [vmem:[#allocation3 + $0x120] sm:$0x3] %v874
    %1254 = vst [vmem:[#allocation3 + $0x128] sm:$0x3] %v907
    %1255 = vst [vmem:[#allocation3 + $0x130] sm:$0x3] %v876
    %1256 = vst [vmem:[#allocation3 + $0x138] sm:$0x3] %v909
    %1257 = vrot.lane.b32.xlu0 %v867, 127
    %v1258 = vpop.permute.xlu0 %1257
    %1259 = vrot.lane.b32.xlu0 %v900, 127
    %v1260 = vpop.permute.xlu0 %1259
    %1261 = vrot.lane.b32.xlu0 %v875, 127
    %v1262 = vpop.permute.xlu0 %1261
    %1263 = vrot.lane.b32.xlu0 %v908, 127
    %v1264 = vpop.permute.xlu0 %1263
    %1265 = vrot.lane.b32.xlu0 %v874, 127
    %v1266 = vpop.permute.xlu0 %1265
    %1267 = vrot.lane.b32.xlu0 %v907, 127
    %v1268 = vpop.permute.xlu0 %1267
    %1269 = vrot.lane.b32.xlu0 %v876, 127
    %v1270 = vpop.permute.xlu0 %1269
    %1271 = vrot.lane.b32.xlu0 %v909, 127
    %v1272 = vpop.permute.xlu0 %1271
    %v1273 = vsel %vm377, %v1270, %v1272
    %v1274 = vsel %vm377, %v1268, %v1270
    %v1275 = vsel %vm377, %v1266, %v1268
    %v1276 = vsel %vm377, %v1264, %v1266
    %v1277 = vsel %vm377, %v1262, %v1264
    %v1278 = vsel %vm377, %v1260, %v1262
    %v1279 = vsel %vm377, %v1258, %v1260
    %v1280 = vsel %vm377, %v1272, %v1258
    %s1281 = scalar_lea.vmem [#allocation9], 5
    %v1282 = vld [vmem:[%s1281] ss:$8 sm:$0xf]
    %v1283 = vld [vmem:[%s1281] ss:$8 sm:$0xf0]
    %v1284 = vor.u32 %v1282, %v1283
    %v1286 = vlaneseq
    %v1287 = vshrl.u32 %v1286, 7
    %v1288 = vsub.s32 0, %v1287
    %v1289 = vrot.slane %v1284, %v1288
    %v1290 = vlaneseq
    %v1291 = vshrl.u32 %v1290, 7
    %v1292 = vsub.s32 1, %v1291
    %v1293 = vrot.slane %v1284, %v1292
    %v1294 = vlaneseq
    %v1295 = vshrl.u32 %v1294, 7
    %v1296 = vsub.s32 2, %v1295
    %v1297 = vrot.slane %v1284, %v1296
    %v1298 = vlaneseq
    %v1299 = vshrl.u32 %v1298, 7
    %v1300 = vsub.s32 3, %v1299
    %v1301 = vrot.slane %v1284, %v1300
    %v1302 = vlaneseq
    %v1303 = vshrl.u32 %v1302, 7
    %v1304 = vsub.s32 4, %v1303
    %v1305 = vrot.slane %v1284, %v1304
    %v1306 = vlaneseq
    %v1307 = vshrl.u32 %v1306, 7
    %v1308 = vsub.s32 5, %v1307
    %v1309 = vrot.slane %v1284, %v1308
    %v1310 = vlaneseq
    %v1311 = vshrl.u32 %v1310, 7
    %v1312 = vsub.s32 6, %v1311
    %v1313 = vrot.slane %v1284, %v1312
    %v1314 = vlaneseq
    %v1315 = vshrl.u32 %v1314, 7
    %v1316 = vsub.s32 7, %v1315
    %v1317 = vrot.slane %v1284, %v1316
    %v1326 = vmul.f32 %v1279, %v1289
    %v1327 = vmul.f32 %v1278, %v1293
    %v1328 = vmul.f32 %v1277, %v1297
    %v1329 = vmul.f32 %v1276, %v1301
    %v1330 = vmul.f32 %v1275, %v1305
    %v1331 = vmul.f32 %v1274, %v1309
    %v1332 = vmul.f32 %v1273, %v1313
    %v1333 = vmul.f32 %v1280, %v1317
    %1334 = vst [vmem:[#allocation3 + $0x140] sm:$0x3] %v1326
    %1335 = vst [vmem:[#allocation3 + $0x148] sm:$0x3] %v1327
    %1336 = vst [vmem:[#allocation3 + $0x150] sm:$0x3] %v1328
    %1337 = vst [vmem:[#allocation3 + $0x158] sm:$0x3] %v1329
    %1338 = vst [vmem:[#allocation3 + $0x160] sm:$0x3] %v1330
    %1339 = vst [vmem:[#allocation3 + $0x168] sm:$0x3] %v1331
    %1340 = vst [vmem:[#allocation3 + $0x170] sm:$0x3] %v1332
    %1341 = vst [vmem:[#allocation3 + $0x178] sm:$0x3] %v1333
    %1342 = vrot.lane.b32.xlu0 %v867, 113
    %v1343 = vpop.permute.xlu0 %1342
    %1344 = vrot.lane.b32.xlu0 %v900, 113
    %v1345 = vpop.permute.xlu0 %1344
    %1346 = vrot.lane.b32.xlu0 %v875, 113
    %v1347 = vpop.permute.xlu0 %1346
    %1348 = vrot.lane.b32.xlu0 %v908, 113
    %v1349 = vpop.permute.xlu0 %1348
    %1350 = vrot.lane.b32.xlu0 %v874, 113
    %v1351 = vpop.permute.xlu0 %1350
    %1352 = vrot.lane.b32.xlu0 %v907, 113
    %v1353 = vpop.permute.xlu0 %1352
    %1354 = vrot.lane.b32.xlu0 %v876, 113
    %v1355 = vpop.permute.xlu0 %1354
    %1356 = vrot.lane.b32.xlu0 %v909, 113
    %v1357 = vpop.permute.xlu0 %1356
    %v1358 = vsel %vm421, %v1355, %v1357
    %v1359 = vsel %vm421, %v1353, %v1355
    %v1360 = vsel %vm421, %v1351, %v1353
    %v1361 = vsel %vm421, %v1349, %v1351
    %v1362 = vsel %vm421, %v1347, %v1349
    %v1363 = vsel %vm421, %v1345, %v1347
    %v1364 = vsel %vm421, %v1343, %v1345
    %v1365 = vsel %vm421, %v1357, %v1343
    %s1366 = scalar_lea.vmem [#allocation9], 6
    %v1367 = vld [vmem:[%s1366] ss:$8 sm:$0xf]
    %v1368 = vld [vmem:[%s1366] ss:$8 sm:$0xf0]
    %v1369 = vor.u32 %v1367, %v1368
    %v1371 = vlaneseq
    %v1372 = vshrl.u32 %v1371, 7
    %v1373 = vsub.s32 0, %v1372
    %v1374 = vrot.slane %v1369, %v1373
    %v1375 = vlaneseq
    %v1376 = vshrl.u32 %v1375, 7
    %v1377 = vsub.s32 1, %v1376
    %v1378 = vrot.slane %v1369, %v1377
    %v1379 = vlaneseq
    %v1380 = vshrl.u32 %v1379, 7
    %v1381 = vsub.s32 2, %v1380
    %v1382 = vrot.slane %v1369, %v1381
    %v1383 = vlaneseq
    %v1384 = vshrl.u32 %v1383, 7
    %v1385 = vsub.s32 3, %v1384
    %v1386 = vrot.slane %v1369, %v1385
    %v1387 = vlaneseq
    %v1388 = vshrl.u32 %v1387, 7
    %v1389 = vsub.s32 4, %v1388
    %v1390 = vrot.slane %v1369, %v1389
    %v1391 = vlaneseq
    %v1392 = vshrl.u32 %v1391, 7
    %v1393 = vsub.s32 5, %v1392
    %v1394 = vrot.slane %v1369, %v1393
    %v1395 = vlaneseq
    %v1396 = vshrl.u32 %v1395, 7
    %v1397 = vsub.s32 6, %v1396
    %v1398 = vrot.slane %v1369, %v1397
    %v1399 = vlaneseq
    %v1400 = vshrl.u32 %v1399, 7
    %v1401 = vsub.s32 7, %v1400
    %v1402 = vrot.slane %v1369, %v1401
    %v1411 = vmul.f32 %v1364, %v1374
    %v1412 = vmul.f32 %v1363, %v1378
    %v1413 = vmul.f32 %v1362, %v1382
    %v1414 = vmul.f32 %v1361, %v1386
    %v1415 = vmul.f32 %v1360, %v1390
    %v1416 = vmul.f32 %v1359, %v1394
    %v1417 = vmul.f32 %v1358, %v1398
    %v1418 = vmul.f32 %v1365, %v1402
    %1419 = vst [vmem:[#allocation3 + $0x180] sm:$0x3] %v1411
    %1420 = vst [vmem:[#allocation3 + $0x188] sm:$0x3] %v1412
    %1421 = vst [vmem:[#allocation3 + $0x190] sm:$0x3] %v1413
    %1422 = vst [vmem:[#allocation3 + $0x198] sm:$0x3] %v1414
    %1423 = vst [vmem:[#allocation3 + $0x1a0] sm:$0x3] %v1415
    %1424 = vst [vmem:[#allocation3 + $0x1a8] sm:$0x3] %v1416
    %1425 = vst [vmem:[#allocation3 + $0x1b0] sm:$0x3] %v1417
    %1426 = vst [vmem:[#allocation3 + $0x1b8] sm:$0x3] %v1418
    %1427 = vrot.lane.b32.xlu0 %v867, 112
    %v1428 = vpop.permute.xlu0 %1427
    %1429 = vrot.lane.b32.xlu0 %v900, 112
    %v1430 = vpop.permute.xlu0 %1429
    %1431 = vrot.lane.b32.xlu0 %v875, 112
    %v1432 = vpop.permute.xlu0 %1431
    %1433 = vrot.lane.b32.xlu0 %v908, 112
    %v1434 = vpop.permute.xlu0 %1433
    %1435 = vrot.lane.b32.xlu0 %v874, 112
    %v1436 = vpop.permute.xlu0 %1435
    %1437 = vrot.lane.b32.xlu0 %v907, 112
    %v1438 = vpop.permute.xlu0 %1437
    %1439 = vrot.lane.b32.xlu0 %v876, 112
    %v1440 = vpop.permute.xlu0 %1439
    %1441 = vrot.lane.b32.xlu0 %v909, 112
    %v1442 = vpop.permute.xlu0 %1441
    %v1443 = vsel %vm465, %v1440, %v1442
    %v1444 = vsel %vm465, %v1438, %v1440
    %v1445 = vsel %vm465, %v1436, %v1438
    %v1446 = vsel %vm465, %v1434, %v1436
    %v1447 = vsel %vm465, %v1432, %v1434
    %v1448 = vsel %vm465, %v1430, %v1432
    %v1449 = vsel %vm465, %v1428, %v1430
    %v1450 = vsel %vm465, %v1442, %v1428
    %s1451 = scalar_lea.vmem [#allocation9], 7
    %v1452 = vld [vmem:[%s1451] ss:$8 sm:$0xf]
    %v1453 = vld [vmem:[%s1451] ss:$8 sm:$0xf0]
    %v1454 = vor.u32 %v1452, %v1453
    %v1456 = vlaneseq
    %v1457 = vshrl.u32 %v1456, 7
    %v1458 = vsub.s32 0, %v1457
    %v1459 = vrot.slane %v1454, %v1458
    %v1460 = vlaneseq
    %v1461 = vshrl.u32 %v1460, 7
    %v1462 = vsub.s32 1, %v1461
    %v1463 = vrot.slane %v1454, %v1462
    %v1464 = vlaneseq
    %v1465 = vshrl.u32 %v1464, 7
    %v1466 = vsub.s32 2, %v1465
    %v1467 = vrot.slane %v1454, %v1466
    %v1468 = vlaneseq
    %v1469 = vshrl.u32 %v1468, 7
    %v1470 = vsub.s32 3, %v1469
    %v1471 = vrot.slane %v1454, %v1470
    %v1472 = vlaneseq
    %v1473 = vshrl.u32 %v1472, 7
    %v1474 = vsub.s32 4, %v1473
    %v1475 = vrot.slane %v1454, %v1474
    %v1476 = vlaneseq
    %v1477 = vshrl.u32 %v1476, 7
    %v1478 = vsub.s32 5, %v1477
    %v1479 = vrot.slane %v1454, %v1478
    %v1480 = vlaneseq
    %v1481 = vshrl.u32 %v1480, 7
    %v1482 = vsub.s32 6, %v1481
    %v1483 = vrot.slane %v1454, %v1482
    %v1484 = vlaneseq
    %v1485 = vshrl.u32 %v1484, 7
    %v1486 = vsub.s32 7, %v1485
    %v1487 = vrot.slane %v1454, %v1486
    %v1496 = vmul.f32 %v1449, %v1459
    %v1497 = vmul.f32 %v1448, %v1463
    %v1498 = vmul.f32 %v1447, %v1467
    %v1499 = vmul.f32 %v1446, %v1471
    %v1500 = vmul.f32 %v1445, %v1475
    %v1501 = vmul.f32 %v1444, %v1479
    %v1502 = vmul.f32 %v1443, %v1483
    %v1503 = vmul.f32 %v1450, %v1487
    %1504 = vst [vmem:[#allocation3 + $0x1c0] sm:$0x3] %v1496
    %1505 = vst [vmem:[#allocation3 + $0x1c8] sm:$0x3] %v1497
    %1506 = vst [vmem:[#allocation3 + $0x1d0] sm:$0x3] %v1498
    %1507 = vst [vmem:[#allocation3 + $0x1d8] sm:$0x3] %v1499
    %1508 = vst [vmem:[#allocation3 + $0x1e0] sm:$0x3] %v1500
    %1509 = vst [vmem:[#allocation3 + $0x1e8] sm:$0x3] %v1501
    %1510 = vst [vmem:[#allocation3 + $0x1f0] sm:$0x3] %v1502
    %1511 = vst [vmem:[#allocation3 + $0x1f8] sm:$0x3] %v1503
    %1512 = vrot.lane.b32.xlu0 %v867, 111
    %v1513 = vpop.permute.xlu0 %1512
    %1514 = vrot.lane.b32.xlu0 %v900, 111
    %v1515 = vpop.permute.xlu0 %1514
    %1516 = vrot.lane.b32.xlu0 %v875, 111
    %v1517 = vpop.permute.xlu0 %1516
    %1518 = vrot.lane.b32.xlu0 %v908, 111
    %v1519 = vpop.permute.xlu0 %1518
    %1520 = vrot.lane.b32.xlu0 %v874, 111
    %v1521 = vpop.permute.xlu0 %1520
    %1522 = vrot.lane.b32.xlu0 %v907, 111
    %v1523 = vpop.permute.xlu0 %1522
    %1524 = vrot.lane.b32.xlu0 %v876, 111
    %v1525 = vpop.permute.xlu0 %1524
    %1526 = vrot.lane.b32.xlu0 %v909, 111
    %v1527 = vpop.permute.xlu0 %1526
    %v1528 = vsel %vm509, %v1525, %v1527
    %v1529 = vsel %vm509, %v1523, %v1525
    %v1530 = vsel %vm509, %v1521, %v1523
    %v1531 = vsel %vm509, %v1519, %v1521
    %v1532 = vsel %vm509, %v1517, %v1519
    %v1533 = vsel %vm509, %v1515, %v1517
    %v1534 = vsel %vm509, %v1513, %v1515
    %v1535 = vsel %vm509, %v1527, %v1513
    %s1536 = scalar_lea.vmem [#allocation9], 64
    %v1537 = vld [vmem:[%s1536] ss:$8 sm:$0xf]
    %v1538 = vld [vmem:[%s1536] ss:$8 sm:$0xf0]
    %v1539 = vor.u32 %v1537, %v1538
    %v1541 = vlaneseq
    %v1542 = vshrl.u32 %v1541, 7
    %v1543 = vsub.s32 0, %v1542
    %v1544 = vrot.slane %v1539, %v1543
    %v1545 = vlaneseq
    %v1546 = vshrl.u32 %v1545, 7
    %v1547 = vsub.s32 1, %v1546
    %v1548 = vrot.slane %v1539, %v1547
    %v1549 = vlaneseq
    %v1550 = vshrl.u32 %v1549, 7
    %v1551 = vsub.s32 2, %v1550
    %v1552 = vrot.slane %v1539, %v1551
    %v1553 = vlaneseq
    %v1554 = vshrl.u32 %v1553, 7
    %v1555 = vsub.s32 3, %v1554
    %v1556 = vrot.slane %v1539, %v1555
    %v1557 = vlaneseq
    %v1558 = vshrl.u32 %v1557, 7
    %v1559 = vsub.s32 4, %v1558
    %v1560 = vrot.slane %v1539, %v1559
    %v1561 = vlaneseq
    %v1562 = vshrl.u32 %v1561, 7
    %v1563 = vsub.s32 5, %v1562
    %v1564 = vrot.slane %v1539, %v1563
    %v1565 = vlaneseq
    %v1566 = vshrl.u32 %v1565, 7
    %v1567 = vsub.s32 6, %v1566
    %v1568 = vrot.slane %v1539, %v1567
    %v1569 = vlaneseq
    %v1570 = vshrl.u32 %v1569, 7
    %v1571 = vsub.s32 7, %v1570
    %v1572 = vrot.slane %v1539, %v1571
    %v1581 = vmul.f32 %v1534, %v1544
    %v1582 = vmul.f32 %v1533, %v1548
    %v1583 = vmul.f32 %v1532, %v1552
    %v1584 = vmul.f32 %v1531, %v1556
    %v1585 = vmul.f32 %v1530, %v1560
    %v1586 = vmul.f32 %v1529, %v1564
    %v1587 = vmul.f32 %v1528, %v1568
    %v1588 = vmul.f32 %v1535, %v1572
    %1589 = vst [vmem:[#allocation3 + $0x200] sm:$0x3] %v1581
    %1590 = vst [vmem:[#allocation3 + $0x208] sm:$0x3] %v1582
    %1591 = vst [vmem:[#allocation3 + $0x210] sm:$0x3] %v1583
    %1592 = vst [vmem:[#allocation3 + $0x218] sm:$0x3] %v1584
    %1593 = vst [vmem:[#allocation3 + $0x220] sm:$0x3] %v1585
    %1594 = vst [vmem:[#allocation3 + $0x228] sm:$0x3] %v1586
    %1595 = vst [vmem:[#allocation3 + $0x230] sm:$0x3] %v1587
    %1596 = vst [vmem:[#allocation3 + $0x238] sm:$0x3] %v1588
    %v1597 = vld [vmem:[%s2] sm:$0x3]
    %v1598 = vld [vmem:[#allocation3] sm:$0xff]
    %v1599 = vld [vmem:[#allocation3 + $0x8] sm:$0xff]
    %v1600 = vld [vmem:[#allocation3 + $0x10] sm:$0xff]
    %v1601 = vld [vmem:[#allocation3 + $0x18] sm:$0xff]
    %v1602 = vld [vmem:[#allocation3 + $0x20] sm:$0xff]
    %v1603 = vld [vmem:[#allocation3 + $0x28] sm:$0xff]
    %v1604 = vld [vmem:[#allocation3 + $0x30] sm:$0xff]
    %v1605 = vld [vmem:[#allocation3 + $0x38] sm:$0xff]
    %v1606 = vld [vmem:[#allocation3 + $0x40] sm:$0xff]
    %v1607 = vld [vmem:[#allocation3 + $0x48] sm:$0xff]
    %v1608 = vld [vmem:[#allocation3 + $0x50] sm:$0xff]
    %v1609 = vld [vmem:[#allocation3 + $0x58] sm:$0xff]
    %v1610 = vld [vmem:[#allocation3 + $0x60] sm:$0xff]
    %v1611 = vld [vmem:[#allocation3 + $0x68] sm:$0xff]
    %v1612 = vld [vmem:[#allocation3 + $0x70] sm:$0xff]
    %v1613 = vld [vmem:[#allocation3 + $0x78] sm:$0xff]
    %v1614 = vld [vmem:[#allocation3 + $0x80] sm:$0xff]
    %v1615 = vld [vmem:[#allocation3 + $0x88] sm:$0xff]
    %v1616 = vld [vmem:[#allocation3 + $0x90] sm:$0xff]
    %v1617 = vld [vmem:[#allocation3 + $0x98] sm:$0xff]
    %v1618 = vld [vmem:[#allocation3 + $0xa0] sm:$0xff]
    %v1619 = vld [vmem:[#allocation3 + $0xa8] sm:$0xff]
    %v1620 = vld [vmem:[#allocation3 + $0xb0] sm:$0xff]
    %v1621 = vld [vmem:[#allocation3 + $0xb8] sm:$0xff]
    %v1622 = vld [vmem:[#allocation3 + $0xc0] sm:$0xff]
    %v1623 = vld [vmem:[#allocation3 + $0xc8] sm:$0xff]
    %v1624 = vld [vmem:[#allocation3 + $0xd0] sm:$0xff]
    %v1625 = vld [vmem:[#allocation3 + $0xd8] sm:$0xff]
    %v1626 = vld [vmem:[#allocation3 + $0xe0] sm:$0xff]
    %v1627 = vld [vmem:[#allocation3 + $0xe8] sm:$0xff]
    %v1628 = vld [vmem:[#allocation3 + $0xf0] sm:$0xff]
    %v1629 = vld [vmem:[#allocation3 + $0xf8] sm:$0xff]
    %v1630 = vld [vmem:[#allocation3 + $0x100] sm:$0xff]
    %v1631 = vld [vmem:[#allocation3 + $0x108] sm:$0xff]
    %v1632 = vld [vmem:[#allocation3 + $0x110] sm:$0xff]
    %v1633 = vld [vmem:[#allocation3 + $0x118] sm:$0xff]
    %v1634 = vld [vmem:[#allocation3 + $0x120] sm:$0xff]
    %v1635 = vld [vmem:[#allocation3 + $0x128] sm:$0xff]
    %v1636 = vld [vmem:[#allocation3 + $0x130] sm:$0xff]
    %v1637 = vld [vmem:[#allocation3 + $0x138] sm:$0xff]
    %v1638 = vld [vmem:[#allocation3 + $0x140] sm:$0xff]
    %v1639 = vld [vmem:[#allocation3 + $0x148] sm:$0xff]
    %v1640 = vld [vmem:[#allocation3 + $0x150] sm:$0xff]
    %v1641 = vld [vmem:[#allocation3 + $0x158] sm:$0xff]
    %v1642 = vld [vmem:[#allocation3 + $0x160] sm:$0xff]
    %v1643 = vld [vmem:[#allocation3 + $0x168] sm:$0xff]
    %v1644 = vld [vmem:[#allocation3 + $0x170] sm:$0xff]
    %v1645 = vld [vmem:[#allocation3 + $0x178] sm:$0xff]
    %v1646 = vld [vmem:[#allocation3 + $0x180] sm:$0xff]
    %v1647 = vld [vmem:[#allocation3 + $0x188] sm:$0xff]
    %v1648 = vld [vmem:[#allocation3 + $0x190] sm:$0xff]
    %v1649 = vld [vmem:[#allocation3 + $0x198] sm:$0xff]
    %v1650 = vld [vmem:[#allocation3 + $0x1a0] sm:$0xff]
    %v1651 = vld [vmem:[#allocation3 + $0x1a8] sm:$0xff]
    %v1652 = vld [vmem:[#allocation3 + $0x1b0] sm:$0xff]
    %v1653 = vld [vmem:[#allocation3 + $0x1b8] sm:$0xff]
    %v1654 = vld [vmem:[#allocation3 + $0x1c0] sm:$0xff]
    %v1655 = vld [vmem:[#allocation3 + $0x1c8] sm:$0xff]
    %v1656 = vld [vmem:[#allocation3 + $0x1d0] sm:$0xff]
    %v1657 = vld [vmem:[#allocation3 + $0x1d8] sm:$0xff]
    %v1658 = vld [vmem:[#allocation3 + $0x1e0] sm:$0xff]
    %v1659 = vld [vmem:[#allocation3 + $0x1e8] sm:$0xff]
    %v1660 = vld [vmem:[#allocation3 + $0x1f0] sm:$0xff]
    %v1661 = vld [vmem:[#allocation3 + $0x1f8] sm:$0xff]
    %v1662 = vld [vmem:[#allocation3 + $0x200] sm:$0xff]
    %v1663 = vld [vmem:[#allocation3 + $0x208] sm:$0xff]
    %v1664 = vld [vmem:[#allocation3 + $0x210] sm:$0xff]
    %v1665 = vld [vmem:[#allocation3 + $0x218] sm:$0xff]
    %v1666 = vld [vmem:[#allocation3 + $0x220] sm:$0xff]
    %v1667 = vld [vmem:[#allocation3 + $0x228] sm:$0xff]
    %v1668 = vld [vmem:[#allocation3 + $0x230] sm:$0xff]
    %v1669 = vld [vmem:[#allocation3 + $0x238] sm:$0xff]
    %v1671 = vsel %vm582, %v1597, 0
    %1673 = vmatprep.subr.mxu0 0.0
    %1674 = vmatpush1.msra.mxu0 0.0
    %1675 = vmatprep.subr.mxu0 0.0
    %1676 = vmatpush1.msra.mxu0 0.0
    %1677 = vmatprep.subr.mxu0 0.0
    %1678 = vmatpush1.msra.mxu0 0.0
    %1679 = vmatprep.subr.mxu0 0.0
    %1680 = vmatpush1.msra.mxu0 0.0
    %1681 = vmatprep.subr.mxu0 0.0
    %1682 = vmatpush1.msra.mxu0 0.0
    %1683 = vmatprep.subr.mxu0 0.0
    %1684 = vmatpush1.msra.mxu0 0.0
    %1685 = vmatprep.subr.mxu0 0.0
    %1686 = vmatpush1.msra.mxu0 0.0
    %1687 = vmatprep.subr.mxu0 %v1663
    %1688 = vmatpush1.msra.mxu0 %v1662
    %1689 = vmatprep.subr.mxu0 %v1655
    %1690 = vmatpush1.msra.mxu0 %v1654
    %1691 = vmatprep.subr.mxu0 %v1647
    %1692 = vmatpush1.msra.mxu0 %v1646
    %1693 = vmatprep.subr.mxu0 %v1639
    %1694 = vmatpush1.msra.mxu0 %v1638
    %1695 = vmatprep.subr.mxu0 %v1631
    %1696 = vmatpush1.msra.mxu0 %v1630
    %1697 = vmatprep.subr.mxu0 %v1623
    %1698 = vmatpush1.msra.mxu0 %v1622
    %1699 = vmatprep.subr.mxu0 %v1615
    %1700 = vmatpush1.msra.mxu0 %v1614
    %1701 = vmatprep.subr.mxu0 %v1607
    %1702 = vmatpush1.msra.mxu0 %v1606
    %1703 = vmatprep.subr.mxu0 %v1599
    %1704 = vmatpush1.msra.mxu0 %v1598
    %1705 = vmatprep.subr.mxu0 0.0
    %1706 = vmatpush2.msra.mxu0 0.0
    %1707 = vmatprep.subr.mxu0 0.0
    %1708 = vmatpush2.msra.mxu0 0.0
    %1709 = vmatprep.subr.mxu0 0.0
    %1710 = vmatpush2.msra.mxu0 0.0
    %1711 = vmatprep.subr.mxu0 0.0
    %1712 = vmatpush2.msra.mxu0 0.0
    %1713 = vmatprep.subr.mxu0 0.0
    %1714 = vmatpush2.msra.mxu0 0.0
    %1715 = vmatprep.subr.mxu0 0.0
    %1716 = vmatpush2.msra.mxu0 0.0
    %1717 = vmatprep.subr.mxu0 0.0
    %1718 = vmatpush2.msra.mxu0 0.0
    %1719 = vmatprep.subr.mxu0 0.0
    %1720 = vmatpush2.msra.mxu0 0.0
    %1721 = vmatprep.subr.mxu0 0.0
    %1722 = vmatpush2.msra.mxu0 0.0
    %1723 = vmatprep.subr.mxu0 0.0
    %1724 = vmatpush2.msra.mxu0 0.0
    %1725 = vmatprep.subr.mxu0 0.0
    %1726 = vmatpush2.msra.mxu0 0.0
    %1727 = vmatprep.subr.mxu0 0.0
    %1728 = vmatpush2.msra.mxu0 0.0
    %1729 = vmatprep.subr.mxu0 0.0
    %1730 = vmatpush2.msra.mxu0 0.0
    %1731 = vmatprep.subr.mxu0 0.0
    %1732 = vmatpush2.msra.mxu0 0.0
    %1733 = vmatprep.subr.mxu0 0.0
    %1734 = vmatpush2.msra.mxu0 0.0
    %1735 = vmatprep.subr.mxu0 0.0
    %1736 = vmatpush2.msra.mxu0 0.0
    %1737 = vmatprep.mubr.f32.mxu0 0.0
    %1738 = vmatmul.mubr.f32.gmra.mxu0 %v1671
    %v1739 = vpop.f32.mrf.mxu0
    %v1740 = vadd.f32 0.0, %v1739
    %v1741 = vpop.f32.mrf.mxu0
    %v1742 = vadd.f32 0.0, %v1741
    %1743 = vdwg.mxu0
    %1744 = vmatprep.subr.mxu0 0.0
    %1745 = vmatpush1.msra.mxu0 0.0
    %1746 = vmatprep.subr.mxu0 0.0
    %1747 = vmatpush1.msra.mxu0 0.0
    %1748 = vmatprep.subr.mxu0 0.0
    %1749 = vmatpush1.msra.mxu0 0.0
    %1750 = vmatprep.subr.mxu0 0.0
    %1751 = vmatpush1.msra.mxu0 0.0
    %1752 = vmatprep.subr.mxu0 0.0
    %1753 = vmatpush1.msra.mxu0 0.0
    %1754 = vmatprep.subr.mxu0 0.0
    %1755 = vmatpush1.msra.mxu0 0.0
    %1756 = vmatprep.subr.mxu0 0.0
    %1757 = vmatpush1.msra.mxu0 0.0
    %1758 = vmatprep.subr.mxu0 %v1665
    %1759 = vmatpush1.msra.mxu0 %v1664
    %1760 = vmatprep.subr.mxu0 %v1657
    %1761 = vmatpush1.msra.mxu0 %v1656
    %1762 = vmatprep.subr.mxu0 %v1649
    %1763 = vmatpush1.msra.mxu0 %v1648
    %1764 = vmatprep.subr.mxu0 %v1641
    %1765 = vmatpush1.msra.mxu0 %v1640
    %1766 = vmatprep.subr.mxu0 %v1633
    %1767 = vmatpush1.msra.mxu0 %v1632
    %1768 = vmatprep.subr.mxu0 %v1625
    %1769 = vmatpush1.msra.mxu0 %v1624
    %1770 = vmatprep.subr.mxu0 %v1617
    %1771 = vmatpush1.msra.mxu0 %v1616
    %1772 = vmatprep.subr.mxu0 %v1609
    %1773 = vmatpush1.msra.mxu0 %v1608
    %1774 = vmatprep.subr.mxu0 %v1601
    %1775 = vmatpush1.msra.mxu0 %v1600
    %1776 = vmatprep.subr.mxu0 0.0
    %1777 = vmatpush2.msra.mxu0 0.0
    %1778 = vmatprep.subr.mxu0 0.0
    %1779 = vmatpush2.msra.mxu0 0.0
    %1780 = vmatprep.subr.mxu0 0.0
    %1781 = vmatpush2.msra.mxu0 0.0
    %1782 = vmatprep.subr.mxu0 0.0
    %1783 = vmatpush2.msra.mxu0 0.0
    %1784 = vmatprep.subr.mxu0 0.0
    %1785 = vmatpush2.msra.mxu0 0.0
    %1786 = vmatprep.subr.mxu0 0.0
    %1787 = vmatpush2.msra.mxu0 0.0
    %1788 = vmatprep.subr.mxu0 0.0
    %1789 = vmatpush2.msra.mxu0 0.0
    %1790 = vmatprep.subr.mxu0 0.0
    %1791 = vmatpush2.msra.mxu0 0.0
    %1792 = vmatprep.subr.mxu0 0.0
    %1793 = vmatpush2.msra.mxu0 0.0
    %1794 = vmatprep.subr.mxu0 0.0
    %1795 = vmatpush2.msra.mxu0 0.0
    %1796 = vmatprep.subr.mxu0 0.0
    %1797 = vmatpush2.msra.mxu0 0.0
    %1798 = vmatprep.subr.mxu0 0.0
    %1799 = vmatpush2.msra.mxu0 0.0
    %1800 = vmatprep.subr.mxu0 0.0
    %1801 = vmatpush2.msra.mxu0 0.0
    %1802 = vmatprep.subr.mxu0 0.0
    %1803 = vmatpush2.msra.mxu0 0.0
    %1804 = vmatprep.subr.mxu0 0.0
    %1805 = vmatpush2.msra.mxu0 0.0
    %1806 = vmatprep.subr.mxu0 0.0
    %1807 = vmatpush2.msra.mxu0 0.0
    %1808 = vmatprep.mubr.f32.mxu0 0.0
    %1809 = vmatmul.mubr.f32.gmra.mxu0 %v1671
    %v1810 = vpop.f32.mrf.mxu0
    %v1811 = vadd.f32 0.0, %v1810
    %v1812 = vpop.f32.mrf.mxu0
    %v1813 = vadd.f32 0.0, %v1812
    %1814 = vdwg.mxu0
    %1815 = vmatprep.subr.mxu0 0.0
    %1816 = vmatpush1.msra.mxu0 0.0
    %1817 = vmatprep.subr.mxu0 0.0
    %1818 = vmatpush1.msra.mxu0 0.0
    %1819 = vmatprep.subr.mxu0 0.0
    %1820 = vmatpush1.msra.mxu0 0.0
    %1821 = vmatprep.subr.mxu0 0.0
    %1822 = vmatpush1.msra.mxu0 0.0
    %1823 = vmatprep.subr.mxu0 0.0
    %1824 = vmatpush1.msra.mxu0 0.0
    %1825 = vmatprep.subr.mxu0 0.0
    %1826 = vmatpush1.msra.mxu0 0.0
    %1827 = vmatprep.subr.mxu0 0.0
    %1828 = vmatpush1.msra.mxu0 0.0
    %1829 = vmatprep.subr.mxu0 %v1667
    %1830 = vmatpush1.msra.mxu0 %v1666
    %1831 = vmatprep.subr.mxu0 %v1659
    %1832 = vmatpush1.msra.mxu0 %v1658
    %1833 = vmatprep.subr.mxu0 %v1651
    %1834 = vmatpush1.msra.mxu0 %v1650
    %1835 = vmatprep.subr.mxu0 %v1643
    %1836 = vmatpush1.msra.mxu0 %v1642
    %1837 = vmatprep.subr.mxu0 %v1635
    %1838 = vmatpush1.msra.mxu0 %v1634
    %1839 = vmatprep.subr.mxu0 %v1627
    %1840 = vmatpush1.msra.mxu0 %v1626
    %1841 = vmatprep.subr.mxu0 %v1619
    %1842 = vmatpush1.msra.mxu0 %v1618
    %1843 = vmatprep.subr.mxu0 %v1611
    %1844 = vmatpush1.msra.mxu0 %v1610
    %1845 = vmatprep.subr.mxu0 %v1603
    %1846 = vmatpush1.msra.mxu0 %v1602
    %1847 = vmatprep.subr.mxu0 0.0
    %1848 = vmatpush2.msra.mxu0 0.0
    %1849 = vmatprep.subr.mxu0 0.0
    %1850 = vmatpush2.msra.mxu0 0.0
    %1851 = vmatprep.subr.mxu0 0.0
    %1852 = vmatpush2.msra.mxu0 0.0
    %1853 = vmatprep.subr.mxu0 0.0
    %1854 = vmatpush2.msra.mxu0 0.0
    %1855 = vmatprep.subr.mxu0 0.0
    %1856 = vmatpush2.msra.mxu0 0.0
    %1857 = vmatprep.subr.mxu0 0.0
    %1858 = vmatpush2.msra.mxu0 0.0
    %1859 = vmatprep.subr.mxu0 0.0
    %1860 = vmatpush2.msra.mxu0 0.0
    %1861 = vmatprep.subr.mxu0 0.0
    %1862 = vmatpush2.msra.mxu0 0.0
    %1863 = vmatprep.subr.mxu0 0.0
    %1864 = vmatpush2.msra.mxu0 0.0
    %1865 = vmatprep.subr.mxu0 0.0
    %1866 = vmatpush2.msra.mxu0 0.0
    %1867 = vmatprep.subr.mxu0 0.0
    %1868 = vmatpush2.msra.mxu0 0.0
    %1869 = vmatprep.subr.mxu0 0.0
    %1870 = vmatpush2.msra.mxu0 0.0
    %1871 = vmatprep.subr.mxu0 0.0
    %1872 = vmatpush2.msra.mxu0 0.0
    %1873 = vmatprep.subr.mxu0 0.0
    %1874 = vmatpush2.msra.mxu0 0.0
    %1875 = vmatprep.subr.mxu0 0.0
    %1876 = vmatpush2.msra.mxu0 0.0
    %1877 = vmatprep.subr.mxu0 0.0
    %1878 = vmatpush2.msra.mxu0 0.0
    %1879 = vmatprep.mubr.f32.mxu0 0.0
    %1880 = vmatmul.mubr.f32.gmra.mxu0 %v1671
    %v1881 = vpop.f32.mrf.mxu0
    %v1882 = vadd.f32 0.0, %v1881
    %v1883 = vpop.f32.mrf.mxu0
    %v1884 = vadd.f32 0.0, %v1883
    %1885 = vdwg.mxu0
    %1886 = vmatprep.subr.mxu0 0.0
    %1887 = vmatpush1.msra.mxu0 0.0
    %1888 = vmatprep.subr.mxu0 0.0
    %1889 = vmatpush1.msra.mxu0 0.0
    %1890 = vmatprep.subr.mxu0 0.0
    %1891 = vmatpush1.msra.mxu0 0.0
    %1892 = vmatprep.subr.mxu0 0.0
    %1893 = vmatpush1.msra.mxu0 0.0
    %1894 = vmatprep.subr.mxu0 0.0
    %1895 = vmatpush1.msra.mxu0 0.0
    %1896 = vmatprep.subr.mxu0 0.0
    %1897 = vmatpush1.msra.mxu0 0.0
    %1898 = vmatprep.subr.mxu0 0.0
    %1899 = vmatpush1.msra.mxu0 0.0
    %1900 = vmatprep.subr.mxu0 %v1669
    %1901 = vmatpush1.msra.mxu0 %v1668
    %1902 = vmatprep.subr.mxu0 %v1661
    %1903 = vmatpush1.msra.mxu0 %v1660
    %1904 = vmatprep.subr.mxu0 %v1653
    %1905 = vmatpush1.msra.mxu0 %v1652
    %1906 = vmatprep.subr.mxu0 %v1645
    %1907 = vmatpush1.msra.mxu0 %v1644
    %1908 = vmatprep.subr.mxu0 %v1637
    %1909 = vmatpush1.msra.mxu0 %v1636
    %1910 = vmatprep.subr.mxu0 %v1629
    %1911 = vmatpush1.msra.mxu0 %v1628
    %1912 = vmatprep.subr.mxu0 %v1621
    %1913 = vmatpush1.msra.mxu0 %v1620
    %1914 = vmatprep.subr.mxu0 %v1613
    %1915 = vmatpush1.msra.mxu0 %v1612
    %1916 = vmatprep.subr.mxu0 %v1605
    %1917 = vmatpush1.msra.mxu0 %v1604
    %1918 = vmatprep.subr.mxu0 0.0
    %1919 = vmatpush2.msra.mxu0 0.0
    %1920 = vmatprep.subr.mxu0 0.0
    %1921 = vmatpush2.msra.mxu0 0.0
    %1922 = vmatprep.subr.mxu0 0.0
    %1923 = vmatpush2.msra.mxu0 0.0
    %1924 = vmatprep.subr.mxu0 0.0
    %1925 = vmatpush2.msra.mxu0 0.0
    %1926 = vmatprep.subr.mxu0 0.0
    %1927 = vmatpush2.msra.mxu0 0.0
    %1928 = vmatprep.subr.mxu0 0.0
    %1929 = vmatpush2.msra.mxu0 0.0
    %1930 = vmatprep.subr.mxu0 0.0
    %1931 = vmatpush2.msra.mxu0 0.0
    %1932 = vmatprep.subr.mxu0 0.0
    %1933 = vmatpush2.msra.mxu0 0.0
    %1934 = vmatprep.subr.mxu0 0.0
    %1935 = vmatpush2.msra.mxu0 0.0
    %1936 = vmatprep.subr.mxu0 0.0
    %1937 = vmatpush2.msra.mxu0 0.0
    %1938 = vmatprep.subr.mxu0 0.0
    %1939 = vmatpush2.msra.mxu0 0.0
    %1940 = vmatprep.subr.mxu0 0.0
    %1941 = vmatpush2.msra.mxu0 0.0
    %1942 = vmatprep.subr.mxu0 0.0
    %1943 = vmatpush2.msra.mxu0 0.0
    %1944 = vmatprep.subr.mxu0 0.0
    %1945 = vmatpush2.msra.mxu0 0.0
    %1946 = vmatprep.subr.mxu0 0.0
    %1947 = vmatpush2.msra.mxu0 0.0
    %1948 = vmatprep.subr.mxu0 0.0
    %1949 = vmatpush2.msra.mxu0 0.0
    %1950 = vmatprep.mubr.f32.mxu0 0.0
    %1951 = vmatmul.mubr.f32.gmra.mxu0 %v1671
    %v1952 = vpop.f32.mrf.mxu0
    %v1953 = vadd.f32 0.0, %v1952
    %v1954 = vpop.f32.mrf.mxu0
    %v1955 = vadd.f32 0.0, %v1954
    %1956 = vdwg.mxu0
    %v1957 = vmax.f32 %v1740, 0.0
    %v1958 = vmax.f32 %v1742, 0.0
    %v1959 = vmax.f32 %v1811, 0.0
    %v1960 = vmax.f32 %v1813, 0.0
    %v1961 = vmax.f32 %v1882, 0.0
    %v1962 = vmax.f32 %v1884, 0.0
    %v1963 = vmax.f32 %v1953, 0.0
    %v1964 = vmax.f32 %v1955, 0.0
    %v1965 = vcombine.low %v1957, %v1961
    %v1967 = vunpack.c.l.s4 1983009808
    %v1968 = vunpack.c.0.s8 %v1967
    %v1969 = vlaneseq
    %v1970 = vshrl.u32 %v1969, 7
    %v1971 = vsub.s32 %v1968, %v1970
    %v1972 = vrot.slane %v1965, %v1971
    %v1973 = vcombine.low %v1959, %v1963
    %v1975 = vunpack.c.l.s4 1983009808
    %v1976 = vunpack.c.0.s8 %v1975
    %v1977 = vlaneseq
    %v1978 = vshrl.u32 %v1977, 7
    %v1979 = vsub.s32 %v1976, %v1978
    %v1980 = vrot.slane %v1973, %v1979
    %v1981 = vcombine.low %v1972, %v1980
    %v1983 = vunpack.c.l.s4 1934713408
    %v1984 = vunpack.c.0.s8 %v1983
    %v1985 = vlaneseq
    %v1986 = vshrl.u32 %v1985, 7
    %v1987 = vsub.s32 %v1984, %v1986
    %v1988 = vrot.slane %v1981, %v1987
    %v1989 = vcombine.high %v1988, 0.0
    %v1990 = vcombine.low %v1958, %v1962
    %v1992 = vunpack.c.l.s4 1983009808
    %v1993 = vunpack.c.0.s8 %v1992
    %v1994 = vlaneseq
    %v1995 = vshrl.u32 %v1994, 7
    %v1996 = vsub.s32 %v1993, %v1995
    %v1997 = vrot.slane %v1990, %v1996
    %v1998 = vcombine.low %v1960, %v1964
    %v2000 = vunpack.c.l.s4 1983009808
    %v2001 = vunpack.c.0.s8 %v2000
    %v2002 = vlaneseq
    %v2003 = vshrl.u32 %v2002, 7
    %v2004 = vsub.s32 %v2001, %v2003
    %v2005 = vrot.slane %v1998, %v2004
    %v2006 = vcombine.low %v1997, %v2005
    %v2008 = vunpack.c.l.s4 1934713408
    %v2009 = vunpack.c.0.s8 %v2008
    %v2010 = vlaneseq
    %v2011 = vshrl.u32 %v2010, 7
    %v2012 = vsub.s32 %v2009, %v2011
    %v2013 = vrot.slane %v2006, %v2012
    %v2014 = vcombine.high %v2013, 0.0
    %vm2015 = vcmask 1043456
    %v2016 = vsel %vm2015, %v1988, 0.0
    %v2017 = vsel %vm2015, %v2013, 0.0
    %v2018 = vadd.f32 %v2016, %v2017
    %2019 = vadd.xlane.f32.xlu0 %v2018
    %v2020 = vpop.xlane.xlu0 %2019
    %v2021 = vsel %vm2015, %v1989, 0.0
    %v2022 = vsel %vm2015, %v2014, 0.0
    %v2023 = vadd.f32 %v2021, %v2022
    %2024 = vadd.xlane.f32.xlu0 %v2023
    %v2025 = vpop.xlane.xlu0 %2024
    %v2026 = vmul.f32 %v2020, 0.00390625
    %v2027 = vmul.f32 %v2025, 0.00390625
    %v2030 = vlaneseq
    %v2031 = vshrl.u32 %v2030, 7
    %v2032 = vsub.s32 %v197, %v2031
    %v2033 = vrot.slane %v2026, %v2032
    %v2034 = vlaneseq
    %v2035 = vshrl.u32 %v2034, 7
    %v2036 = vsub.s32 %v197, %v2035
    %v2037 = vrot.slane %v2027, %v2036
    %vm2038 = vcmask 1041409
    %v2039 = vsel %vm2038, %v2037, %v2033
    %2041 = vxpose.xlu0.b32.start [1/16] %v2039, 128
    %2042 = vxpose.xlu0.b32.cont [2/16] 0.0, 128
    %2043 = vxpose.xlu0.b32.cont [3/16] 0.0, 128
    %2044 = vxpose.xlu0.b32.cont [4/16] 0.0, 128
    %2045 = vxpose.xlu0.b32.cont [5/16] 0.0, 128
    %2046 = vxpose.xlu0.b32.cont [6/16] 0.0, 128
    %2047 = vxpose.xlu0.b32.cont [7/16] 0.0, 128
    %2048 = vxpose.xlu0.b32.cont [8/16] 0.0, 128
    %2049 = vxpose.xlu0.b32.cont [9/16] 0.0, 128
    %2050 = vxpose.xlu0.b32.cont [10/16] 0.0, 128
    %2051 = vxpose.xlu0.b32.cont [11/16] 0.0, 128
    %2052 = vxpose.xlu0.b32.cont [12/16] 0.0, 128
    %2053 = vxpose.xlu0.b32.cont [13/16] 0.0, 128
    %2054 = vxpose.xlu0.b32.cont [14/16] 0.0, 128
    %2055 = vxpose.xlu0.b32.cont [15/16] 0.0, 128
    %2056 = vxpose.xlu0.b32.end [16/16] 0.0, 128
    %v2057 = vpop.trf.xlu0
    %v2058 = vpop.trf.xlu0
    %v2059 = vpop.trf.xlu0
    %v2060 = vpop.trf.xlu0
    %v2061 = vpop.trf.xlu0
    %v2062 = vpop.trf.xlu0
    %v2063 = vpop.trf.xlu0
    %v2064 = vpop.trf.xlu0
    %v2065 = vpop.trf.xlu0
    %v2066 = vpop.trf.xlu0
    %v2067 = vpop.trf.xlu0
    %v2068 = vpop.trf.xlu0
    %v2069 = vpop.trf.xlu0
    %v2070 = vpop.trf.xlu0
    %v2071 = vpop.trf.xlu0
    %v2072 = vpop.trf.xlu0
    %v2073 = vld [vmem:[%s5] sm:$0x3]
    %v2074 = vld [vmem:[%s6] sm:$0x1]
    %v2076 = vlaneseq
    %v2077 = vshrl.u32 %v2076, 7
    %v2078 = vsub.s32 0, %v2077
    %v2079 = vrot.slane %v2074, %v2078
    %vm2081 = vcmask 15360
    %v2083 = vsel %vm2081, %v2057, 0
    %vm2085 = vcmask 1041408
    %v2087 = vsel %vm2085, %v2073, 0
    %2089 = vmatprep.subr.mxu0 0.0
    %2090 = vmatpush1.msra.mxu0 0.0
    %2091 = vmatprep.subr.mxu0 0.0
    %2092 = vmatpush1.msra.mxu0 0.0
    %2093 = vmatprep.subr.mxu0 0.0
    %2094 = vmatpush1.msra.mxu0 0.0
    %2095 = vmatprep.subr.mxu0 0.0
    %2096 = vmatpush1.msra.mxu0 0.0
    %2097 = vmatprep.subr.mxu0 0.0
    %2098 = vmatpush1.msra.mxu0 0.0
    %2099 = vmatprep.subr.mxu0 0.0
    %2100 = vmatpush1.msra.mxu0 0.0
    %2101 = vmatprep.subr.mxu0 0.0
    %2102 = vmatpush1.msra.mxu0 0.0
    %2103 = vmatprep.subr.mxu0 0.0
    %2104 = vmatpush1.msra.mxu0 0.0
    %2105 = vmatprep.subr.mxu0 0.0
    %2106 = vmatpush1.msra.mxu0 0.0
    %2107 = vmatprep.subr.mxu0 0.0
    %2108 = vmatpush1.msra.mxu0 0.0
    %2109 = vmatprep.subr.mxu0 0.0
    %2110 = vmatpush1.msra.mxu0 0.0
    %2111 = vmatprep.subr.mxu0 0.0
    %2112 = vmatpush1.msra.mxu0 0.0
    %2113 = vmatprep.subr.mxu0 0.0
    %2114 = vmatpush1.msra.mxu0 0.0
    %2115 = vmatprep.subr.mxu0 0.0
    %2116 = vmatpush1.msra.mxu0 0.0
    %2117 = vmatprep.subr.mxu0 0.0
    %2118 = vmatpush1.msra.mxu0 0.0
    %2119 = vmatprep.subr.mxu0 0.0
    %2120 = vmatpush1.msra.mxu0 %v2087
    %2121 = vmatprep.subr.mxu0 0.0
    %2122 = vmatpush2.msra.mxu0 0.0
    %2123 = vmatprep.subr.mxu0 0.0
    %2124 = vmatpush2.msra.mxu0 0.0
    %2125 = vmatprep.subr.mxu0 0.0
    %2126 = vmatpush2.msra.mxu0 0.0
    %2127 = vmatprep.subr.mxu0 0.0
    %2128 = vmatpush2.msra.mxu0 0.0
    %2129 = vmatprep.subr.mxu0 0.0
    %2130 = vmatpush2.msra.mxu0 0.0
    %2131 = vmatprep.subr.mxu0 0.0
    %2132 = vmatpush2.msra.mxu0 0.0
    %2133 = vmatprep.subr.mxu0 0.0
    %2134 = vmatpush2.msra.mxu0 0.0
    %2135 = vmatprep.subr.mxu0 0.0
    %2136 = vmatpush2.msra.mxu0 0.0
    %2137 = vmatprep.subr.mxu0 0.0
    %2138 = vmatpush2.msra.mxu0 0.0
    %2139 = vmatprep.subr.mxu0 0.0
    %2140 = vmatpush2.msra.mxu0 0.0
    %2141 = vmatprep.subr.mxu0 0.0
    %2142 = vmatpush2.msra.mxu0 0.0
    %2143 = vmatprep.subr.mxu0 0.0
    %2144 = vmatpush2.msra.mxu0 0.0
    %2145 = vmatprep.subr.mxu0 0.0
    %2146 = vmatpush2.msra.mxu0 0.0
    %2147 = vmatprep.subr.mxu0 0.0
    %2148 = vmatpush2.msra.mxu0 0.0
    %2149 = vmatprep.subr.mxu0 0.0
    %2150 = vmatpush2.msra.mxu0 0.0
    %2151 = vmatprep.subr.mxu0 0.0
    %2152 = vmatpush2.msra.mxu0 0.0
    %2153 = vmatprep.mubr.f32.mxu0 0.0
    %2154 = vmatmul.mubr.f32.gmra.mxu0 %v2083
    %v2155 = vpop.f32.mrf.mxu0
    %v2156 = vadd.f32 %v2079, %v2155
    %v2157 = vpop.f32.mrf.mxu0
    %2158 = vdwg.mxu0
    %vm2159 = vcmask 11264
    %v2160 = vsel %vm2159, %v2156, -inf
    %2161 = vmax.xlane.f32.xlu0 %v2160
    %v2162 = vpop.xlane.xlu0 %2161
    %vm2163 = vcmp.eq.f32.partialorder %v2156, %v2162
    %v2164 = vsub.s32 2, %v197
    %v2165 = vsel %vm2163, %v2164, 0
    %v2166 = vsel %vm2159, %v2165, 2147483648
    %v2167 = vand.u32 %v2166, 65535
    %v2168 = vshra.s32 %v2166, 16
    %v2169 = vcvt.s32.f32 %v2167
    %v2170 = vcvt.s32.f32 %v2168
    %2171 = vmax.xlane.f32.xlu0 %v2170
    %v2172 = vpop.xlane.xlu0 %2171
    %vm2173 = vcmp.eq.f32.partialorder %v2170, %v2172
    %v2174 = vsel %vm2173, %v2169, -inf
    %2175 = vmax.xlane.f32.xlu0 %v2174
    %v2176 = vpop.xlane.xlu0 %2175
    %v2177 = vcvt.f32.s32 %v2176
    %v2178 = vcvt.f32.s32 %v2172
    %v2179 = vshll.u32 %v2178, 16
    %v2180 = vadd.s32 %v2179, %v2177
    %vm2181 = vcmp.eq.s32.totalorder %v2165, %v2180
    %v2182 = vsel %vm2181, 1.0, 0.0
    %v2183 = vsel %vm2015, %v180, 0.0
    %v2184 = vsel %vm2015, %v184, 0.0
    %v2185 = vadd.f32 %v2183, %v2184
    %v2186 = vsel %vm2015, %v181, 0.0
    %v2187 = vadd.f32 %v2185, %v2186
    %v2188 = vsel %vm2015, %v185, 0.0
    %v2189 = vadd.f32 %v2187, %v2188
    %2190 = vadd.xlane.f32.xlu0 %v2189
    %v2191 = vpop.xlane.xlu0 %2190
    %v2192 = vsel %vm2159, %v2182, 0.0
    %v2193 = vrot.slane %v2192, 4
    %v2194 = vadd.f32 %v2192, %v2193
    %v2195 = vrot.slane %v2194, 2
    %v2196 = vadd.f32 %v2194, %v2195
    %v2197 = vrot.slane %v2196, 1
    %v2198 = vadd.f32 %v2196, %v2197
    %v2199 = vmul.f32 %v2198, 512.0
    %v2200 = vmul.f32 %v2182, %v2191
    %v2201 = vsel %vm2159, %v2200, 0.0
    %v2202 = vrot.slane %v2201, 4
    %v2203 = vadd.f32 %v2201, %v2202
    %v2204 = vrot.slane %v2203, 2
    %v2205 = vadd.f32 %v2203, %v2204
    %v2206 = vrot.slane %v2205, 1
    %v2207 = vadd.f32 %v2205, %v2206
    %v2208 = vmax.f32 %v2199, 1.0
    %v2209 = vrcp.pop %v2208
    %v2210 = vmul.f32 %v2207, %v2209
    %v2211 = vmul.f32 %v2182, %v2210
    %v2212 = vsel %vm2159, %v2211, 0.0
    %2213 = vadd.xlane.f32.xlu0 %v2212
    %v2214 = vpop.xlane.xlu0 %2213
    %v2217 = vunpack.c.l.s4 839922192
    %v2218 = vunpack.c.0.s8 %v2217
    %v2219 = vlaneseq
    %v2220 = vshrl.u32 %v2219, 7
    %v2221 = vsub.s32 %v2218, %v2220
    %v2222 = vrot.slane %v2214, %v2221
    %v2224 = vsub.f32 %v180, %v2222
    %v2225 = vsub.f32 %v181, %v2222
    %v2226 = vmul.f32 %v2224, %v2224
    %v2227 = vmul.f32 %v2225, %v2225
    %v2230 = vcombine.high %v2226, %v2226
    %v2231 = vcombine.high %v2227, %v2227
    %v2234 = vsel %vm2015, %v2226, 0.0
    %v2235 = vsel %vm2015, %v2230, 0.0
    %v2236 = vadd.f32 %v2234, %v2235
    %v2237 = vsel %vm2015, %v2227, 0.0
    %v2238 = vadd.f32 %v2236, %v2237
    %v2239 = vsel %vm2015, %v2231, 0.0
    %v2240 = vadd.f32 %v2238, %v2239
    %2241 = vadd.xlane.f32.xlu0 %v2240
    %v2242 = vpop.xlane.xlu0 %2241
    %v2243 = vmul.f32 %v2182, %v2242
    %v2244 = vsel %vm2159, %v2243, 0.0
    %v2245 = vrot.slane %v2244, 4
    %v2246 = vadd.f32 %v2244, %v2245
    %v2247 = vrot.slane %v2246, 2
    %v2248 = vadd.f32 %v2246, %v2247
    %v2249 = vrot.slane %v2248, 1
    %v2250 = vadd.f32 %v2248, %v2249
    %v2251 = vsub.f32 %v2199, 1.0
    %v2252 = vmax.f32 %v2251, 1.0
    %v2253 = vrcp.pop %v2252
    %v2254 = vmul.f32 %v2250, %v2253
    %v2255 = vadd.f32 %v2254, 1e-05
    %v2256 = vrsqrt.pop %v2255
    %v2257 = vmul.f32 %v2182, %v2256
    %v2258 = vsel %vm2159, %v2257, 0.0
    %2259 = vadd.xlane.f32.xlu0 %v2258
    %v2260 = vpop.xlane.xlu0 %2259
    %v2261 = vld [vmem:[%s7] sm:$0xf]
    %v2262 = vmul.f32 %v2261, %v2260
    %2264 = vset.pattern.permute.xlu0 0
    %2265 = vperm.xlu0 %2264, %v2262
    %v2266 = vpop.permute.xlu0 %2265
    %v2268 = vunpack.c.l.s4 839922192
    %v2269 = vunpack.c.0.s8 %v2268
    %v2270 = vlaneseq
    %v2271 = vshrl.u32 %v2270, 7
    %v2272 = vsub.s32 %v2269, %v2271
    %v2273 = vrot.slane %v2266, %v2272
    %v2275 = vmul.f32 %v2224, %v2273
    %v2276 = vmul.f32 %v2225, %v2273
    %v2277 = vld [vmem:[%s8] sm:$0xf]
    %2279 = vset.pattern.permute.xlu0 0
    %2280 = vperm.xlu0 %2279, %v2277
    %v2281 = vpop.permute.xlu0 %2280
    %v2283 = vunpack.c.l.s4 839922192
    %v2284 = vunpack.c.0.s8 %v2283
    %v2285 = vlaneseq
    %v2286 = vshrl.u32 %v2285, 7
    %v2287 = vsub.s32 %v2284, %v2286
    %v2288 = vrot.slane %v2281, %v2287
    %v2290 = vadd.f32 %v2275, %v2288
    %v2291 = vadd.f32 %v2276, %v2288
    %2292 = vst [vmem:[#allocation10] sm:$0xff] %v2290
    %2293 = vst [vmem:[#allocation10 + $0x8] sm:$0xff] %v2291
    // Predicated region
    $region50: #{tpu_custom_call.1} parent=1 // pred_check
      _
    $region51: #{tpu_custom_call.1} parent=1 // pred_check_branch
      %2295 = sbr.rel (0) target = $region53
    $region52: #{tpu_custom_call.1} parent=1 // pred_region
      %s2297 = ssub.s32 256, 256
      %2298 = vsyncadd [#allocation6], %s2297
      %s2300 = sshll.u32 [#allocation10], 4
      %s2301 = int_to_ptr.vmem [resolvable:$true] %s2300
      %2303 = dma.vmem_to_hbm [thread:$0]  %s2301, 256, %s9, [#allocation6]
    $region53: #{tpu_custom_call.1} parent=1 // pred_fallthru
      _
    // Predicated region
    $region54: #{tpu_custom_call.1} parent=1 // pred_check
      _
    $region55: #{tpu_custom_call.1} parent=1 // pred_check_branch
      %2305 = sbr.rel (0) target = $region57
    $region56: #{tpu_custom_call.1} parent=1 // pred_region
      %2306 = dma.done [#allocation6], 256
    $region57: #{tpu_custom_call.1} parent=1 // pred_fallthru
      _
    %2307 = vsyncpa [#allocation5], 1
    %2308 = vsyncpa [#allocation8], 1
    %2309 = vsyncpa [#allocation6], 1

</llo_original>
